<compile_context>
chip_gen: v6e
topology: v6e:2x2x1
jax: 0.10.0
libtpu: 0.0.40
codegen_flags: <defaults>
</compile_context>

<pallas_src>
import math
import numpy as np

import jax
import jax.numpy as jnp
from jax.experimental import pallas as pl
from jax.experimental.pallas import tpu as pltpu

# ---------------------------------------------------------------------------
# Model hyper-parameters (small, consistent with the module's __init__)
# ---------------------------------------------------------------------------
D_MODEL = 32
D_STATE = 16
D_CONV = 4
EXPAND = 2
D_INNER = EXPAND * D_MODEL                       # 64
DT_RANK = math.ceil(D_MODEL / 16)                # 2
BATCH = 2
SEQ = 8                                          # "channel" axis in the PyTorch code
ROWS = BATCH * SEQ                               # 16 flattened (b, t) rows
OUT_PAD = 128                                    # lane-dense output width


def _silu(v):
    # sigmoid via tanh: one EUP op instead of exp + divide.
    return v * (0.5 * (jnp.tanh(0.5 * v) + 1.0))


def _softplus(v):
    # stable: softplus(v) = max(v, 0) + log(1 + exp(-|v|))
    return jnp.maximum(v, 0.0) + jnp.log(1.0 + jnp.exp(-jnp.abs(v)))


# ---------------------------------------------------------------------------
# Pallas kernel: one batch element (SEQ rows) per grid step
# ---------------------------------------------------------------------------
def _mamba_kernel(hs_ref,        # (SEQ, D_MODEL)     f32
                  win_ref,       # (D_MODEL, 2*D_INNER)  bf16  in_proj (x|z), transposed
                  wconv_ref,     # (D_CONV, D_INNER)  f32   depthwise conv taps
                  bconv_ref,     # (1, D_INNER)       f32   conv bias
                  wdtf_ref,      # (D_INNER, D_INNER) f32   fused dt projection, transposed
                  dtb_ref,       # (1, D_INNER)       f32   dt_proj bias
                  wxb_ref,       # (D_STATE, D_INNER) bf16  x_proj rows for B (natural layout)
                  wxct_ref,      # (D_INNER, SEQ*D_STATE) bf16  x_proj C rows, transposed + lane-tiled
                  nega_ref,      # (D_STATE, D_INNER) f32   -exp(A_log), transposed
                  d_ref,         # (1, D_INNER)       f32   D
                  wout_ref,      # (D_INNER, OUT_PAD) bf16  out_proj, transposed + zero-padded
                  out_ref):      # (SEQ, OUT_PAD)     f32
    f32 = jnp.float32
    bf16 = jnp.bfloat16

    hs = hs_ref[...]                                                    # (SEQ, D_MODEL)

    # in_proj (no bias): single bf16 matmul, output is lane-dense (128 cols).
    xz = jnp.dot(hs.astype(bf16), win_ref[...], preferred_element_type=f32)
    x = xz[:, :D_INNER]                                                 # (SEQ, D_INNER)
    z = xz[:, D_INNER:]

    # Causal depthwise conv1d + SiLU: sublane shifts of a zero-padded x (no MXU
    # work, no NxN shift operators).  Padding of 8 rows keeps the concat aligned.
    wt = wconv_ref[...]                                                 # (D_CONV, D_INNER)
    PAD = 8
    xpad = jnp.concatenate([jnp.zeros((PAD, D_INNER), f32), x], axis=0)  # (PAD+SEQ, D_INNER)
    conv = x * wt[D_CONV - 1:D_CONV, :] + bconv_ref[...]
    for w in range(D_CONV - 1):
        start = PAD - (D_CONV - 1) + w          # source row t - (D_CONV-1-w)
        conv = conv + xpad[start:start + SEQ, :] * wt[w:w + 1, :]
    xc = _silu(conv)                                                    # (SEQ, D_INNER)
    xc_bf = xc.astype(bf16)

    # dt projection kept in f32 (feeds the exponential); fused weight is fine at
    # toy size (keep it factorized DT_RANK x d_inner at real sizes -- see wrapper).
    dt = jnp.dot(xc, wdtf_ref[...], preferred_element_type=f32)         # (SEQ, D_INNER)
    delta = _softplus(dt + dtb_ref[...])

    # B in (D_STATE, SEQ): NT contraction gives lane-column layout, so the
    # per-step B broadcast below is a plain (16,1)x(1,64) outer broadcast.
    BmatT = jax.lax.dot_general(wxb_ref[...], xc_bf, (((1,), (1,)), ((), ())),
                                preferred_element_type=f32)             # (D_STATE, SEQ)
    # C projected against a lane-tiled weight -> (SEQ, SEQ*D_STATE); masked into a
    # block-diagonal matrix later for a single-matmul readout.
    Ctiled = jnp.dot(xc_bf, wxct_ref[...], preferred_element_type=f32)  # (SEQ, SEQ*D_STATE)

    negA = nega_ref[...]                                                # (D_STATE, D_INNER)
    dxu = delta * xc                                                    # (SEQ, D_INNER)

    # Hoist all transcendentals / broadcasts off the recurrence: dA and dBu for
    # every timestep are computed up front (they do not depend on h), so the EUP
    # exps pipeline and overlap with the matmuls above.
    dA_list = [jnp.exp(delta[t:t + 1, :] * negA) for t in range(SEQ)]        # each (D_STATE, D_INNER)
    dBu_list = [dxu[t:t + 1, :] * BmatT[:, t:t + 1] for t in range(SEQ)]     # each (D_STATE, D_INNER)

    # Serial scan: loop body is a pure VPU fma on (D_STATE, D_INNER).
    # TODO(synk): for real sequence lengths use lax.fori_loop or the chunked
    # (SSD) matmul formulation instead of a full Python unroll.
    h = jnp.zeros((D_STATE, D_INNER), f32)
    h_list = []
    for t in range(SEQ):
        h = dA_list[t] * h + dBu_list[t]
        h_list.append(h)

    # Readout entirely off the recurrence chain, as ONE MXU matmul:
    # y[t] = C[t] . h[t]  ==  blockdiag(C) @ stack(h).
    Hcat = jnp.concatenate(h_list, axis=0)                              # (SEQ*D_STATE, D_INNER)
    row_i = jax.lax.broadcasted_iota(jnp.int32, (SEQ, SEQ * D_STATE), 0)
    col_i = jax.lax.broadcasted_iota(jnp.int32, (SEQ, SEQ * D_STATE), 1)
    lo = row_i * D_STATE
    c_bd = jnp.where((col_i >= lo) & (col_i < lo + D_STATE), Ctiled, 0.0)
    y = jnp.dot(c_bd, Hcat, preferred_element_type=f32)                 # (SEQ, D_INNER)

    y = y + xc * d_ref[...]                                             # + D * u
    y = y * _silu(z)                                                    # gate with SiLU(z)
    # out_proj: bf16 matmul against a zero-padded (D_INNER, 128) weight so the
    # store is a full, unmasked lane-dense tile.
    out_ref[...] = jnp.dot(y.astype(bf16), wout_ref[...], preferred_element_type=f32)


# ---------------------------------------------------------------------------
# Wrapper: trace-time weight re-layout / fusion + pallas_call
# ---------------------------------------------------------------------------
def prepare_kernel_params(params):
    """Pre-transpose / fuse / cast weights (mathematically identical to the module)."""
    w_in, wconv, bconv, wx, wdt, dtb, a_log, dvec, wout = params
    bf16 = jnp.bfloat16

    win_bf = w_in.T.astype(bf16)                              # (D_MODEL, 2*D_INNER): cols [:D_INNER]=x, rest=z
    wconv_t = wconv.T                                         # (D_CONV, D_INNER) f32
    bconv_r = bconv.reshape(1, D_INNER)
    # NOTE(review): keep this factorized (DT_RANK, d_inner) at real d_inner sizes;
    # fusing is only acceptable because d_inner=64 here.
    wdtf = (wdt @ wx[:DT_RANK]).T                             # (D_INNER, D_INNER) f32
    dtb_r = dtb.reshape(1, D_INNER)
    wxb_bf = wx[DT_RANK:DT_RANK + D_STATE].astype(bf16)       # (D_STATE, D_INNER)
    wxc_t = wx[DT_RANK + D_STATE:].T                          # (D_INNER, D_STATE)
    wxct_bf = jnp.tile(wxc_t, (1, SEQ)).astype(bf16)          # (D_INNER, SEQ*D_STATE)
    nega = (-jnp.exp(a_log)).T                                # (D_STATE, D_INNER) f32
    d_r = dvec.reshape(1, D_INNER)
    wout_pad = jnp.pad(wout.T, ((0, 0), (0, OUT_PAD - D_MODEL))).astype(bf16)  # (D_INNER, OUT_PAD)
    return (win_bf, wconv_t, bconv_r, wdtf, dtb_r, wxb_bf, wxct_bf, nega, d_r, wout_pad)


def mamba_forward(hidden_states, params):
    bsz, seq, dm = hidden_states.shape
    assert (bsz, seq, dm) == (BATCH, SEQ, D_MODEL)

    kparams = prepare_kernel_params(params)
    hs2 = hidden_states.reshape(ROWS, D_MODEL)
    args = (hs2,) + kparams

    in_specs = [pl.BlockSpec((SEQ, D_MODEL), lambda b: (b, 0))]
    in_specs += [pl.BlockSpec(p.shape, lambda b: (0, 0)) for p in kparams]  # weights resident
    out_spec = pl.BlockSpec((SEQ, OUT_PAD), lambda b: (b, 0))

    out = pl.pallas_call(
        _mamba_kernel,
        out_shape=jax.ShapeDtypeStruct((ROWS, OUT_PAD), jnp.float32),
        grid_spec=pltpu.PrefetchScalarGridSpec(
            num_scalar_prefetch=0,
            grid=(BATCH,),                       # >=2 parallel steps -> both TCs on v7x
            in_specs=in_specs,
            out_specs=out_spec,
        ),
        compiler_params=pltpu.CompilerParams(dimension_semantics=("parallel",)),
    )(*args)
    return out[:, :D_MODEL].reshape(bsz, seq, dm)


# ---------------------------------------------------------------------------
# Pure-JAX reference (mirrors the PyTorch forward semantics, un-fused weights)
# ---------------------------------------------------------------------------
def _sigmoid(v):
    return 1.0 / (1.0 + jnp.exp(-v))


def mamba_ref(hs, params):
    w_in, wconv, bconv, wx, wdt, dtb, a_log, dvec, wout = params
    bsz, L, _ = hs.shape

    xz = jnp.einsum('bld,ed->ble', hs, w_in)                  # (B, L, 2*D_INNER)
    x, z = xz[..., :D_INNER], xz[..., D_INNER:]

    xpad = jnp.pad(x, ((0, 0), (D_CONV - 1, 0), (0, 0)))
    conv = jnp.broadcast_to(bconv[None, None, :], x.shape)
    for w in range(D_CONV):
        conv = conv + xpad[:, w:w + L, :] * wconv[:, w][None, None, :]
    xc = conv * _sigmoid(conv)

    x_dbl = jnp.einsum('ble,re->blr', xc, wx)                 # (B, L, R + 2N)
    dt_low = x_dbl[..., :DT_RANK]
    Bm = x_dbl[..., DT_RANK:DT_RANK + D_STATE]
    Cm = x_dbl[..., DT_RANK + D_STATE:]
    dt = jnp.einsum('blr,er->ble', dt_low, wdt)
    delta = jnp.maximum(dt + dtb[None, None, :], 0.0) + \
        jnp.log(1.0 + jnp.exp(-jnp.abs(dt + dtb[None, None, :])))
    A = -jnp.exp(a_log)                                       # (D_INNER, D_STATE)

    h = jnp.zeros((bsz, D_INNER, D_STATE), jnp.float32)
    ys = []
    for t in range(L):
        dA = jnp.exp(delta[:, t, :, None] * A[None])
        dBu = delta[:, t, :, None] * xc[:, t, :, None] * Bm[:, t, None, :]
        h = dA * h + dBu
        ys.append(jnp.einsum('ben,bn->be', h, Cm[:, t]))
    y = jnp.stack(ys, axis=1)                                 # (B, L, D_INNER)
    y = y + xc * dvec[None, None, :]
    y = y * (z * _sigmoid(z))
    return jnp.einsum('ble,oe->blo', y, wout)


# ---------------------------------------------------------------------------
# Deterministic parameter construction (shapes per Mamba.__init__)
# ---------------------------------------------------------------------------
def make_params(key):
    ks = jax.random.split(key, 8)
    dt_min, dt_max, dt_init_floor = 0.001, 0.1, 1e-4
    dt_init_std = DT_RANK ** -0.5

    w_in = jax.random.normal(ks[0], (2 * D_INNER, D_MODEL), jnp.float32) / math.sqrt(D_MODEL)
    wconv = jax.random.normal(ks[1], (D_INNER, D_CONV), jnp.float32) / math.sqrt(D_CONV)
    bconv = jax.random.normal(ks[2], (D_INNER,), jnp.float32) * 0.1
    wx = jax.random.normal(ks[3], (DT_RANK + 2 * D_STATE, D_INNER), jnp.float32) / math.sqrt(D_INNER)
    wdt = jax.random.uniform(ks[4], (D_INNER, DT_RANK), jnp.float32,
                             minval=-dt_init_std, maxval=dt_init_std)
    u = jax.random.uniform(ks[5], (D_INNER,), jnp.float32)
    dt = jnp.exp(u * (math.log(dt_max) - math.log(dt_min)) + math.log(dt_min))
    dt = jnp.maximum(dt, dt_init_floor)
    dtb = dt + jnp.log(-jnp.expm1(-dt))                       # inverse softplus
    a_log = jnp.log(jnp.broadcast_to(
        jnp.arange(1, D_STATE + 1, dtype=jnp.float32)[None, :], (D_INNER, D_STATE)))
    dvec = jnp.ones((D_INNER,), jnp.float32)
    wout = jax.random.normal(ks[6], (D_MODEL, D_INNER), jnp.float32) / math.sqrt(D_INNER)

    return (w_in, wconv, bconv, wx, wdt, dtb, a_log, dvec, wout)


if __name__ == "__main__":
    key = jax.random.PRNGKey(0)
    k_in, k_par = jax.random.split(key)
    params = make_params(k_par)
    hidden_states = jax.random.normal(k_in, (BATCH, SEQ, D_MODEL), jnp.float32)

    out = jax.block_until_ready(mamba_forward(hidden_states, params))
    ref = jax.block_until_ready(mamba_ref(hidden_states, params))
    # Tolerance slightly widened vs. pure-f32 (2e-2) because the projection
    # matmuls now use bf16 operands (f32 accumulation), per the perf review.
    np.testing.assert_allclose(np.asarray(out), np.asarray(ref), rtol=2e-2, atol=2e-2)

    print("KERNEL_OK")
</pallas_src>

<mosaic_0001>
module attributes {stable_mosaic.version = 11 : i64} {
  func.func @_mamba_kernel(%arg0: i32, %arg1: memref<8x32xf32, #tpu.memory_space<vmem>>, %arg2: memref<32x128xbf16, #tpu.memory_space<vmem>>, %arg3: memref<4x64xf32, #tpu.memory_space<vmem>>, %arg4: memref<1x64xf32, #tpu.memory_space<vmem>>, %arg5: memref<64x64xf32, #tpu.memory_space<vmem>>, %arg6: memref<1x64xf32, #tpu.memory_space<vmem>>, %arg7: memref<16x64xbf16, #tpu.memory_space<vmem>>, %arg8: memref<64x128xbf16, #tpu.memory_space<vmem>>, %arg9: memref<16x64xf32, #tpu.memory_space<vmem>>, %arg10: memref<1x64xf32, #tpu.memory_space<vmem>>, %arg11: memref<64x128xbf16, #tpu.memory_space<vmem>>, %arg12: memref<8x128xf32, #tpu.memory_space<vmem>>) attributes {dimension_semantics = [#tpu.dimension_semantics<parallel>], iteration_bounds = array<i64: 2>, scalar_prefetch = 0 : i64, scratch_operands = 0 : i64, tpu.core_type = #tpu.core_type<tc>, window_params = [{transform_indices = @transform_0, window_bounds = array<i64: 8, 32>}, {pipeline_mode = #tpu.pipeline_mode<synchronous>, transform_indices = @transform_1, window_bounds = array<i64: 32, 128>}, {pipeline_mode = #tpu.pipeline_mode<synchronous>, transform_indices = @transform_2, window_bounds = array<i64: 4, 64>}, {pipeline_mode = #tpu.pipeline_mode<synchronous>, transform_indices = @transform_3, window_bounds = array<i64: 1, 64>}, {pipeline_mode = #tpu.pipeline_mode<synchronous>, transform_indices = @transform_4, window_bounds = array<i64: 64, 64>}, {pipeline_mode = #tpu.pipeline_mode<synchronous>, transform_indices = @transform_5, window_bounds = array<i64: 1, 64>}, {pipeline_mode = #tpu.pipeline_mode<synchronous>, transform_indices = @transform_6, window_bounds = array<i64: 16, 64>}, {pipeline_mode = #tpu.pipeline_mode<synchronous>, transform_indices = @transform_7, window_bounds = array<i64: 64, 128>}, {pipeline_mode = #tpu.pipeline_mode<synchronous>, transform_indices = @transform_8, window_bounds = array<i64: 16, 64>}, {pipeline_mode = #tpu.pipeline_mode<synchronous>, transform_indices = @transform_9, window_bounds = array<i64: 1, 64>}, {pipeline_mode = #tpu.pipeline_mode<synchronous>, transform_indices = @transform_10, window_bounds = array<i64: 64, 128>}, {transform_indices = @transform_11, window_bounds = array<i64: 8, 128>}]} {
    %c0 = arith.constant 0 : index
    %c0_0 = arith.constant 0 : index
    %0 = vector.load %arg1[%c0, %c0_0] : memref<8x32xf32, #tpu.memory_space<vmem>>, vector<8x32xf32>
    %1 = arith.truncf %0 : vector<8x32xf32> to vector<8x32xbf16>
    %c0_1 = arith.constant 0 : index
    %c0_2 = arith.constant 0 : index
    %2 = vector.load %arg2[%c0_1, %c0_2] : memref<32x128xbf16, #tpu.memory_space<vmem>>, vector<32x128xbf16>
    %cst = arith.constant dense<0.000000e+00> : vector<8x128xf32>
    %3 = tpu.matmul %1, %2, %cst {dimension_numbers = #tpu.dot_dimension_numbers<[1], [0], [0], [1], [0, 0, 1, 1], [], []>} : vector<8x32xbf16>, vector<32x128xbf16>, vector<8x128xf32> -> vector<8x128xf32>
    %4 = vector.extract_strided_slice %3 {offsets = [0, 0], sizes = [8, 64], strides = [1, 1]} : vector<8x128xf32> to vector<8x64xf32>
    %5 = vector.extract_strided_slice %3 {offsets = [0, 64], sizes = [8, 64], strides = [1, 1]} : vector<8x128xf32> to vector<8x64xf32>
    %c0_3 = arith.constant 0 : index
    %c0_4 = arith.constant 0 : index
    %6 = vector.load %arg3[%c0_3, %c0_4] : memref<4x64xf32, #tpu.memory_space<vmem>>, vector<4x64xf32>
    %cst_5 = arith.constant 0.000000e+00 : f32
    %7 = vector.broadcast %cst_5 : f32 to vector<8x64xf32>
    %8 = tpu.concatenate %7, %4 in 0 : vector<8x64xf32>, vector<8x64xf32> -> vector<16x64xf32>
    %9 = vector.extract_strided_slice %6 {offsets = [3, 0], sizes = [1, 64], strides = [1, 1]} : vector<4x64xf32> to vector<1x64xf32>
    %10 = vector.broadcast %9 : vector<1x64xf32> to vector<8x64xf32>
    %11 = arith.mulf %4, %10 : vector<8x64xf32>
    %c0_6 = arith.constant 0 : index
    %c0_7 = arith.constant 0 : index
    %12 = vector.load %arg4[%c0_6, %c0_7] : memref<1x64xf32, #tpu.memory_space<vmem>>, vector<1x64xf32>
    %13 = vector.broadcast %12 : vector<1x64xf32> to vector<8x64xf32>
    %14 = arith.addf %11, %13 : vector<8x64xf32>
    %15 = vector.extract_strided_slice %8 {offsets = [5, 0], sizes = [8, 64], strides = [1, 1]} : vector<16x64xf32> to vector<8x64xf32>
    %16 = vector.extract_strided_slice %6 {offsets = [0, 0], sizes = [1, 64], strides = [1, 1]} : vector<4x64xf32> to vector<1x64xf32>
    %17 = vector.broadcast %16 : vector<1x64xf32> to vector<8x64xf32>
    %18 = arith.mulf %15, %17 : vector<8x64xf32>
    %19 = arith.addf %14, %18 : vector<8x64xf32>
    %20 = vector.extract_strided_slice %8 {offsets = [6, 0], sizes = [8, 64], strides = [1, 1]} : vector<16x64xf32> to vector<8x64xf32>
    %21 = vector.extract_strided_slice %6 {offsets = [1, 0], sizes = [1, 64], strides = [1, 1]} : vector<4x64xf32> to vector<1x64xf32>
    %22 = vector.broadcast %21 : vector<1x64xf32> to vector<8x64xf32>
    %23 = arith.mulf %20, %22 : vector<8x64xf32>
    %24 = arith.addf %19, %23 : vector<8x64xf32>
    %25 = vector.extract_strided_slice %8 {offsets = [7, 0], sizes = [8, 64], strides = [1, 1]} : vector<16x64xf32> to vector<8x64xf32>
    %26 = vector.extract_strided_slice %6 {offsets = [2, 0], sizes = [1, 64], strides = [1, 1]} : vector<4x64xf32> to vector<1x64xf32>
    %27 = vector.broadcast %26 : vector<1x64xf32> to vector<8x64xf32>
    %28 = arith.mulf %25, %27 : vector<8x64xf32>
    %29 = arith.addf %24, %28 : vector<8x64xf32>
    %cst_8 = arith.constant 5.000000e-01 : f32
    %30 = vector.broadcast %cst_8 : f32 to vector<8x64xf32>
    %31 = arith.mulf %30, %29 : vector<8x64xf32>
    %32 = math.tanh %31 : vector<8x64xf32>
    %cst_9 = arith.constant 1.000000e+00 : f32
    %33 = vector.broadcast %cst_9 : f32 to vector<8x64xf32>
    %34 = arith.addf %32, %33 : vector<8x64xf32>
    %cst_10 = arith.constant 5.000000e-01 : f32
    %35 = vector.broadcast %cst_10 : f32 to vector<8x64xf32>
    %36 = arith.mulf %35, %34 : vector<8x64xf32>
    %37 = arith.mulf %29, %36 : vector<8x64xf32>
    %38 = arith.truncf %37 : vector<8x64xf32> to vector<8x64xbf16>
    %c0_11 = arith.constant 0 : index
    %c0_12 = arith.constant 0 : index
    %39 = vector.load %arg5[%c0_11, %c0_12] : memref<64x64xf32, #tpu.memory_space<vmem>>, vector<64x64xf32>
    %cst_13 = arith.constant dense<0.000000e+00> : vector<8x64xf32>
    %40 = tpu.matmul %37, %39, %cst_13 {dimension_numbers = #tpu.dot_dimension_numbers<[1], [0], [0], [1], [0, 0, 1, 1], [], []>} : vector<8x64xf32>, vector<64x64xf32>, vector<8x64xf32> -> vector<8x64xf32>
    %c0_14 = arith.constant 0 : index
    %c0_15 = arith.constant 0 : index
    %41 = vector.load %arg6[%c0_14, %c0_15] : memref<1x64xf32, #tpu.memory_space<vmem>>, vector<1x64xf32>
    %42 = vector.broadcast %41 : vector<1x64xf32> to vector<8x64xf32>
    %43 = arith.addf %40, %42 : vector<8x64xf32>
    %cst_16 = arith.constant 0.000000e+00 : f32
    %44 = vector.broadcast %cst_16 : f32 to vector<8x64xf32>
    %45 = arith.maximumf %43, %44 : vector<8x64xf32>
    %46 = math.absf %43 : vector<8x64xf32>
    %cst_17 = arith.constant 0.000000e+00 : f32
    %47 = vector.broadcast %cst_17 : f32 to vector<8x64xf32>
    %48 = arith.subf %47, %46 : vector<8x64xf32>
    %49 = math.exp %48 : vector<8x64xf32>
    %cst_18 = arith.constant 1.000000e+00 : f32
    %50 = vector.broadcast %cst_18 : f32 to vector<8x64xf32>
    %51 = arith.addf %50, %49 : vector<8x64xf32>
    %52 = math.log %51 : vector<8x64xf32>
    %53 = arith.addf %45, %52 : vector<8x64xf32>
    %c0_19 = arith.constant 0 : index
    %c0_20 = arith.constant 0 : index
    %54 = vector.load %arg7[%c0_19, %c0_20] : memref<16x64xbf16, #tpu.memory_space<vmem>>, vector<16x64xbf16>
    %cst_21 = arith.constant dense<0.000000e+00> : vector<16x8xf32>
    %55 = tpu.matmul %54, %38, %cst_21 {dimension_numbers = #tpu.dot_dimension_numbers<[1], [1], [0], [0], [0, 0, 1, 0], [], []>} : vector<16x64xbf16>, vector<8x64xbf16>, vector<16x8xf32> -> vector<16x8xf32>
    %c0_22 = arith.constant 0 : index
    %c0_23 = arith.constant 0 : index
    %56 = vector.load %arg8[%c0_22, %c0_23] : memref<64x128xbf16, #tpu.memory_space<vmem>>, vector<64x128xbf16>
    %cst_24 = arith.constant dense<0.000000e+00> : vector<8x128xf32>
    %57 = tpu.matmul %38, %56, %cst_24 {dimension_numbers = #tpu.dot_dimension_numbers<[1], [0], [0], [1], [0, 0, 1, 1], [], []>} : vector<8x64xbf16>, vector<64x128xbf16>, vector<8x128xf32> -> vector<8x128xf32>
    %c0_25 = arith.constant 0 : index
    %c0_26 = arith.constant 0 : index
    %58 = vector.load %arg9[%c0_25, %c0_26] : memref<16x64xf32, #tpu.memory_space<vmem>>, vector<16x64xf32>
    %59 = arith.mulf %53, %37 : vector<8x64xf32>
    %60 = vector.extract_strided_slice %53 {offsets = [0, 0], sizes = [1, 64], strides = [1, 1]} : vector<8x64xf32> to vector<1x64xf32>
    %61 = vector.broadcast %60 : vector<1x64xf32> to vector<16x64xf32>
    %62 = arith.mulf %61, %58 : vector<16x64xf32>
    %63 = math.exp %62 : vector<16x64xf32>
    %64 = vector.extract_strided_slice %53 {offsets = [1, 0], sizes = [1, 64], strides = [1, 1]} : vector<8x64xf32> to vector<1x64xf32>
    %65 = vector.broadcast %64 : vector<1x64xf32> to vector<16x64xf32>
    %66 = arith.mulf %65, %58 : vector<16x64xf32>
    %67 = math.exp %66 : vector<16x64xf32>
    %68 = vector.extract_strided_slice %53 {offsets = [2, 0], sizes = [1, 64], strides = [1, 1]} : vector<8x64xf32> to vector<1x64xf32>
    %69 = vector.broadcast %68 : vector<1x64xf32> to vector<16x64xf32>
    %70 = arith.mulf %69, %58 : vector<16x64xf32>
    %71 = math.exp %70 : vector<16x64xf32>
    %72 = vector.extract_strided_slice %53 {offsets = [3, 0], sizes = [1, 64], strides = [1, 1]} : vector<8x64xf32> to vector<1x64xf32>
    %73 = vector.broadcast %72 : vector<1x64xf32> to vector<16x64xf32>
    %74 = arith.mulf %73, %58 : vector<16x64xf32>
    %75 = math.exp %74 : vector<16x64xf32>
    %76 = vector.extract_strided_slice %53 {offsets = [4, 0], sizes = [1, 64], strides = [1, 1]} : vector<8x64xf32> to vector<1x64xf32>
    %77 = vector.broadcast %76 : vector<1x64xf32> to vector<16x64xf32>
    %78 = arith.mulf %77, %58 : vector<16x64xf32>
    %79 = math.exp %78 : vector<16x64xf32>
    %80 = vector.extract_strided_slice %53 {offsets = [5, 0], sizes = [1, 64], strides = [1, 1]} : vector<8x64xf32> to vector<1x64xf32>
    %81 = vector.broadcast %80 : vector<1x64xf32> to vector<16x64xf32>
    %82 = arith.mulf %81, %58 : vector<16x64xf32>
    %83 = math.exp %82 : vector<16x64xf32>
    %84 = vector.extract_strided_slice %53 {offsets = [6, 0], sizes = [1, 64], strides = [1, 1]} : vector<8x64xf32> to vector<1x64xf32>
    %85 = vector.broadcast %84 : vector<1x64xf32> to vector<16x64xf32>
    %86 = arith.mulf %85, %58 : vector<16x64xf32>
    %87 = math.exp %86 : vector<16x64xf32>
    %88 = vector.extract_strided_slice %53 {offsets = [7, 0], sizes = [1, 64], strides = [1, 1]} : vector<8x64xf32> to vector<1x64xf32>
    %89 = vector.broadcast %88 : vector<1x64xf32> to vector<16x64xf32>
    %90 = arith.mulf %89, %58 : vector<16x64xf32>
    %91 = math.exp %90 : vector<16x64xf32>
    %92 = vector.extract_strided_slice %59 {offsets = [0, 0], sizes = [1, 64], strides = [1, 1]} : vector<8x64xf32> to vector<1x64xf32>
    %93 = vector.extract_strided_slice %55 {offsets = [0, 0], sizes = [16, 1], strides = [1, 1]} : vector<16x8xf32> to vector<16x1xf32>
    %94 = vector.broadcast %92 : vector<1x64xf32> to vector<16x64xf32>
    %95 = vector.broadcast %93 : vector<16x1xf32> to vector<16x64xf32>
    %96 = arith.mulf %94, %95 : vector<16x64xf32>
    %97 = vector.extract_strided_slice %59 {offsets = [1, 0], sizes = [1, 64], strides = [1, 1]} : vector<8x64xf32> to vector<1x64xf32>
    %98 = vector.extract_strided_slice %55 {offsets = [0, 1], sizes = [16, 1], strides = [1, 1]} : vector<16x8xf32> to vector<16x1xf32>
    %99 = vector.broadcast %97 : vector<1x64xf32> to vector<16x64xf32>
    %100 = vector.broadcast %98 : vector<16x1xf32> to vector<16x64xf32>
    %101 = arith.mulf %99, %100 : vector<16x64xf32>
    %102 = vector.extract_strided_slice %59 {offsets = [2, 0], sizes = [1, 64], strides = [1, 1]} : vector<8x64xf32> to vector<1x64xf32>
    %103 = vector.extract_strided_slice %55 {offsets = [0, 2], sizes = [16, 1], strides = [1, 1]} : vector<16x8xf32> to vector<16x1xf32>
    %104 = vector.broadcast %102 : vector<1x64xf32> to vector<16x64xf32>
    %105 = vector.broadcast %103 : vector<16x1xf32> to vector<16x64xf32>
    %106 = arith.mulf %104, %105 : vector<16x64xf32>
    %107 = vector.extract_strided_slice %59 {offsets = [3, 0], sizes = [1, 64], strides = [1, 1]} : vector<8x64xf32> to vector<1x64xf32>
    %108 = vector.extract_strided_slice %55 {offsets = [0, 3], sizes = [16, 1], strides = [1, 1]} : vector<16x8xf32> to vector<16x1xf32>
    %109 = vector.broadcast %107 : vector<1x64xf32> to vector<16x64xf32>
    %110 = vector.broadcast %108 : vector<16x1xf32> to vector<16x64xf32>
    %111 = arith.mulf %109, %110 : vector<16x64xf32>
    %112 = vector.extract_strided_slice %59 {offsets = [4, 0], sizes = [1, 64], strides = [1, 1]} : vector<8x64xf32> to vector<1x64xf32>
    %113 = vector.extract_strided_slice %55 {offsets = [0, 4], sizes = [16, 1], strides = [1, 1]} : vector<16x8xf32> to vector<16x1xf32>
    %114 = vector.broadcast %112 : vector<1x64xf32> to vector<16x64xf32>
    %115 = vector.broadcast %113 : vector<16x1xf32> to vector<16x64xf32>
    %116 = arith.mulf %114, %115 : vector<16x64xf32>
    %117 = vector.extract_strided_slice %59 {offsets = [5, 0], sizes = [1, 64], strides = [1, 1]} : vector<8x64xf32> to vector<1x64xf32>
    %118 = vector.extract_strided_slice %55 {offsets = [0, 5], sizes = [16, 1], strides = [1, 1]} : vector<16x8xf32> to vector<16x1xf32>
    %119 = vector.broadcast %117 : vector<1x64xf32> to vector<16x64xf32>
    %120 = vector.broadcast %118 : vector<16x1xf32> to vector<16x64xf32>
    %121 = arith.mulf %119, %120 : vector<16x64xf32>
    %122 = vector.extract_strided_slice %59 {offsets = [6, 0], sizes = [1, 64], strides = [1, 1]} : vector<8x64xf32> to vector<1x64xf32>
    %123 = vector.extract_strided_slice %55 {offsets = [0, 6], sizes = [16, 1], strides = [1, 1]} : vector<16x8xf32> to vector<16x1xf32>
    %124 = vector.broadcast %122 : vector<1x64xf32> to vector<16x64xf32>
    %125 = vector.broadcast %123 : vector<16x1xf32> to vector<16x64xf32>
    %126 = arith.mulf %124, %125 : vector<16x64xf32>
    %127 = vector.extract_strided_slice %59 {offsets = [7, 0], sizes = [1, 64], strides = [1, 1]} : vector<8x64xf32> to vector<1x64xf32>
    %128 = vector.extract_strided_slice %55 {offsets = [0, 7], sizes = [16, 1], strides = [1, 1]} : vector<16x8xf32> to vector<16x1xf32>
    %129 = vector.broadcast %127 : vector<1x64xf32> to vector<16x64xf32>
    %130 = vector.broadcast %128 : vector<16x1xf32> to vector<16x64xf32>
    %131 = arith.mulf %129, %130 : vector<16x64xf32>
    %cst_27 = arith.constant 0.000000e+00 : f32
    %132 = vector.broadcast %cst_27 : f32 to vector<16x64xf32>
    %133 = arith.mulf %63, %132 : vector<16x64xf32>
    %134 = arith.addf %133, %96 : vector<16x64xf32>
    %135 = arith.mulf %67, %134 : vector<16x64xf32>
    %136 = arith.addf %135, %101 : vector<16x64xf32>
    %137 = arith.mulf %71, %136 : vector<16x64xf32>
    %138 = arith.addf %137, %106 : vector<16x64xf32>
    %139 = arith.mulf %75, %138 : vector<16x64xf32>
    %140 = arith.addf %139, %111 : vector<16x64xf32>
    %141 = arith.mulf %79, %140 : vector<16x64xf32>
    %142 = arith.addf %141, %116 : vector<16x64xf32>
    %143 = arith.mulf %83, %142 : vector<16x64xf32>
    %144 = arith.addf %143, %121 : vector<16x64xf32>
    %145 = arith.mulf %87, %144 : vector<16x64xf32>
    %146 = arith.addf %145, %126 : vector<16x64xf32>
    %147 = arith.mulf %91, %146 : vector<16x64xf32>
    %148 = arith.addf %147, %131 : vector<16x64xf32>
    %149 = tpu.concatenate %134, %136, %138, %140, %142, %144, %146, %148 in 0 : vector<16x64xf32>, vector<16x64xf32>, vector<16x64xf32>, vector<16x64xf32>, vector<16x64xf32>, vector<16x64xf32>, vector<16x64xf32>, vector<16x64xf32> -> vector<128x64xf32>
    %150 = tpu.iota {dimensions = array<i32: 0>} : vector<8x128xi32>
    %151 = tpu.iota {dimensions = array<i32: 1>} : vector<8x128xi32>
    %c16_i32 = arith.constant 16 : i32
    %152 = vector.broadcast %c16_i32 : i32 to vector<8x128xi32>
    %153 = arith.muli %150, %152 : vector<8x128xi32>
    %154 = arith.cmpi sge, %151, %153 : vector<8x128xi32>
    %c16_i32_28 = arith.constant 16 : i32
    %155 = vector.broadcast %c16_i32_28 : i32 to vector<8x128xi32>
    %156 = arith.addi %153, %155 : vector<8x128xi32>
    %157 = arith.cmpi slt, %151, %156 : vector<8x128xi32>
    %158 = arith.andi %154, %157 : vector<8x128xi1>
    %cst_29 = arith.constant 0.000000e+00 : f32
    %159 = vector.broadcast %cst_29 : f32 to vector<8x128xf32>
    %160 = arith.select %158, %57, %159 : vector<8x128xi1>, vector<8x128xf32>
    %cst_30 = arith.constant dense<0.000000e+00> : vector<8x64xf32>
    %161 = tpu.matmul %160, %149, %cst_30 {dimension_numbers = #tpu.dot_dimension_numbers<[1], [0], [0], [1], [0, 0, 1, 1], [], []>} : vector<8x128xf32>, vector<128x64xf32>, vector<8x64xf32> -> vector<8x64xf32>
    %c0_31 = arith.constant 0 : index
    %c0_32 = arith.constant 0 : index
    %162 = vector.load %arg10[%c0_31, %c0_32] : memref<1x64xf32, #tpu.memory_space<vmem>>, vector<1x64xf32>
    %163 = vector.broadcast %162 : vector<1x64xf32> to vector<8x64xf32>
    %164 = arith.mulf %37, %163 : vector<8x64xf32>
    %165 = arith.addf %161, %164 : vector<8x64xf32>
    %cst_33 = arith.constant 5.000000e-01 : f32
    %166 = vector.broadcast %cst_33 : f32 to vector<8x64xf32>
    %167 = arith.mulf %166, %5 : vector<8x64xf32>
    %168 = math.tanh %167 : vector<8x64xf32>
    %cst_34 = arith.constant 1.000000e+00 : f32
    %169 = vector.broadcast %cst_34 : f32 to vector<8x64xf32>
    %170 = arith.addf %168, %169 : vector<8x64xf32>
    %cst_35 = arith.constant 5.000000e-01 : f32
    %171 = vector.broadcast %cst_35 : f32 to vector<8x64xf32>
    %172 = arith.mulf %171, %170 : vector<8x64xf32>
    %173 = arith.mulf %5, %172 : vector<8x64xf32>
    %174 = arith.mulf %165, %173 : vector<8x64xf32>
    %175 = arith.truncf %174 : vector<8x64xf32> to vector<8x64xbf16>
    %c0_36 = arith.constant 0 : index
    %c0_37 = arith.constant 0 : index
    %176 = vector.load %arg11[%c0_36, %c0_37] : memref<64x128xbf16, #tpu.memory_space<vmem>>, vector<64x128xbf16>
    %cst_38 = arith.constant dense<0.000000e+00> : vector<8x128xf32>
    %177 = tpu.matmul %175, %176, %cst_38 {dimension_numbers = #tpu.dot_dimension_numbers<[1], [0], [0], [1], [0, 0, 1, 1], [], []>} : vector<8x64xbf16>, vector<64x128xbf16>, vector<8x128xf32> -> vector<8x128xf32>
    %c0_39 = arith.constant 0 : index
    %c0_40 = arith.constant 0 : index
    %178 = vector.load %arg12[%c0_39, %c0_40] : memref<8x128xf32, #tpu.memory_space<vmem>>, vector<8x128xf32>
    tpu.vector_store %arg12[%c0_39, %c0_40], %177 {strides = array<i32>} : memref<8x128xf32, #tpu.memory_space<vmem>>, vector<8x128xf32>,
    return
  }
  func.func @transform_0(%arg0: i32) -> (i32, i32) {
    %c0_i32 = arith.constant 0 : i32
    %c0_i32_0 = arith.constant 0 : i32
    return %arg0, %c0_i32 : i32, i32
  }
  func.func @transform_1(%arg0: i32) -> (i32, i32) {
    %c0_i32 = arith.constant 0 : i32
    %c0_i32_0 = arith.constant 0 : i32
    %c0_i32_1 = arith.constant 0 : i32
    return %c0_i32, %c0_i32_0 : i32, i32
  }
  func.func @transform_2(%arg0: i32) -> (i32, i32) {
    %c0_i32 = arith.constant 0 : i32
    %c0_i32_0 = arith.constant 0 : i32
    %c0_i32_1 = arith.constant 0 : i32
    return %c0_i32, %c0_i32_0 : i32, i32
  }
  func.func @transform_3(%arg0: i32) -> (i32, i32) {
    %c0_i32 = arith.constant 0 : i32
    %c0_i32_0 = arith.constant 0 : i32
    %c0_i32_1 = arith.constant 0 : i32
    return %c0_i32, %c0_i32_0 : i32, i32
  }
  func.func @transform_4(%arg0: i32) -> (i32, i32) {
    %c0_i32 = arith.constant 0 : i32
    %c0_i32_0 = arith.constant 0 : i32
    %c0_i32_1 = arith.constant 0 : i32
    return %c0_i32, %c0_i32_0 : i32, i32
  }
  func.func @transform_5(%arg0: i32) -> (i32, i32) {
    %c0_i32 = arith.constant 0 : i32
    %c0_i32_0 = arith.constant 0 : i32
    %c0_i32_1 = arith.constant 0 : i32
    return %c0_i32, %c0_i32_0 : i32, i32
  }
  func.func @transform_6(%arg0: i32) -> (i32, i32) {
    %c0_i32 = arith.constant 0 : i32
    %c0_i32_0 = arith.constant 0 : i32
    %c0_i32_1 = arith.constant 0 : i32
    return %c0_i32, %c0_i32_0 : i32, i32
  }
  func.func @transform_7(%arg0: i32) -> (i32, i32) {
    %c0_i32 = arith.constant 0 : i32
    %c0_i32_0 = arith.constant 0 : i32
    %c0_i32_1 = arith.constant 0 : i32
    return %c0_i32, %c0_i32_0 : i32, i32
  }
  func.func @transform_8(%arg0: i32) -> (i32, i32) {
    %c0_i32 = arith.constant 0 : i32
    %c0_i32_0 = arith.constant 0 : i32
    %c0_i32_1 = arith.constant 0 : i32
    return %c0_i32, %c0_i32_0 : i32, i32
  }
  func.func @transform_9(%arg0: i32) -> (i32, i32) {
    %c0_i32 = arith.constant 0 : i32
    %c0_i32_0 = arith.constant 0 : i32
    %c0_i32_1 = arith.constant 0 : i32
    return %c0_i32, %c0_i32_0 : i32, i32
  }
  func.func @transform_10(%arg0: i32) -> (i32, i32) {
    %c0_i32 = arith.constant 0 : i32
    %c0_i32_0 = arith.constant 0 : i32
    %c0_i32_1 = arith.constant 0 : i32
    return %c0_i32, %c0_i32_0 : i32, i32
  }
  func.func @transform_11(%arg0: i32) -> (i32, i32) {
    %c0_i32 = arith.constant 0 : i32
    %c0_i32_0 = arith.constant 0 : i32
    return %arg0, %c0_i32 : i32, i32
  }
}

</mosaic_0001>

<llo_original>
// kernel: tpu_custom_call.1
$region0: #{tpu_custom_call.1}
  #allocation0 [shape = 'u32[]', space=smem, size = 0x4, offset = 0x4, fixed_abs, tag = 'smem constant byte address 0x4 - core index']
  #allocation1 [shape = 'u32[144,128]{1,0:T(1,128)}', space=vmem, size = 0x12000, scoped, tag = 'internal scratch']
  %s0 = inlined_call_operand.hbm [shape: f32[16,32], index: 0, kind: input, shape index: {}]
  %s1 = inlined_call_operand.hbm [shape: bf16[32,128], index: 1, kind: input, shape index: {}]
  %s2 = inlined_call_operand.hbm [shape: f32[4,64], index: 2, kind: input, shape index: {}]
  %s3 = inlined_call_operand.vmem [shape: f32[1,64], index: 3, kind: input, shape index: {}]
  %s4 = inlined_call_operand.hbm [shape: f32[64,64], index: 4, kind: input, shape index: {}]
  %s5 = inlined_call_operand.vmem [shape: f32[1,64], index: 5, kind: input, shape index: {}]
  %s6 = inlined_call_operand.vmem [shape: bf16[16,64], index: 6, kind: input, shape index: {}]
  %s7 = inlined_call_operand.hbm [shape: bf16[64,128], index: 7, kind: input, shape index: {}]
  %s8 = inlined_call_operand.hbm [shape: f32[16,64], index: 8, kind: input, shape index: {}]
  %s9 = inlined_call_operand.vmem [shape: f32[1,64], index: 9, kind: input, shape index: {}]
  %s10 = inlined_call_operand.hbm [shape: bf16[64,128], index: 10, kind: input, shape index: {}]
  %s11 = inlined_call_operand.hbm [shape: f32[16,128], index: 11, kind: output, shape index: {}]
  %s12 = sld [smem:[#allocation0]]
  $region105: #{tpu_custom_call.1} parent=0
    _
  %s14 = ssub.s32 1, %s12
  %s15 = scalar_select 0, %s14, %s12
  $region1: #{tpu_custom_call.1} parent=0
    #allocation2 [shape = 'u8[8192]{0}', space=vmem, size = 0x2000, scoped, tag = 'input window, operand 0']
    #allocation3 [shape = 's32[2]{0}', space=sflag, size = 0x8, scoped, tag = 'scoped memory for tpu_custom_call.1']
    #allocation4 [shape = 's32[2]{0}', space=sflag, size = 0x8, scoped, tag = 'scoped memory for tpu_custom_call.1']
    #allocation5 [shape = 'u8[8192]{0}', space=vmem, size = 0x2000, scoped, tag = 'input window, operand 1, single buffered']
    #allocation6 [shape = 's32[1]{0}', space=sflag, size = 0x4, scoped, tag = 'scoped memory for tpu_custom_call.1']
    #allocation7 [shape = 'u8[2048]{0}', space=vmem, size = 0x800, scoped, tag = 'input window, operand 2, single buffered']
    #allocation8 [shape = 'u8[32768]{0}', space=vmem, size = 0x8000, scoped, tag = 'input window, operand 4, single buffered']
    #allocation9 [shape = 's32[1]{0}', space=sflag, size = 0x4, scoped, tag = 'scoped memory for tpu_custom_call.1']
    #allocation10 [shape = 'u8[16384]{0}', space=vmem, size = 0x4000, scoped, tag = 'input window, operand 7, single buffered']
    #allocation11 [shape = 'u8[8192]{0}', space=vmem, size = 0x2000, scoped, tag = 'input window, operand 8, single buffered']
    #allocation12 [shape = 's32[1]{0}', space=sflag, size = 0x4, scoped, tag = 'scoped memory for tpu_custom_call.1']
    #allocation13 [shape = 'u8[16384]{0}', space=vmem, size = 0x4000, scoped, tag = 'input window, operand 10, single buffered']
    #allocation14 [shape = 'u8[8192]{0}', space=vmem, size = 0x2000, scoped, tag = 'output window, operand 0']
    %16 = vsyncpa [#allocation3], 0
    %s17 = scalar_lea.sflag [#allocation3], 1
    %18 = vsyncpa %s17, 0
    %19 = vsyncpa [#allocation6], 0
    %20 = vsyncpa [#allocation9], 0
    %21 = vsyncpa [#allocation12], 0
    %22 = vsyncpa [#allocation4], 0
    %s23 = scalar_lea.sflag [#allocation4], 1
    %24 = vsyncpa %s23, 0
    loop: start=0, step=1, limit=4
    $region2: #{tpu_custom_call.1} parent=1 // loop_pre_header
      _
    $region3: #{tpu_custom_call.1} parent=1 // loop_header
      %s26 = sphi 0, %s30
      %p27 = scmp.ge.s32.totalorder %s26, 4
      %s36 = sphi 0, %s38
      %s39 = sphi 0, %s36
      %s40 = sphi 0, %s39
      %s56 = sphi 0, %s40
      %s60 = sphi 0, %s60
      %s62 = sphi 0, %s60
      %s63 = sphi 0, %s62
      %s77 = sphi 0, %s63
      %s81 = sphi 0, %s81
      %s83 = sphi 0, %s81
      %s84 = sphi 0, %s83
      %s98 = sphi 0, %s84
      %s102 = sphi 0, %s102
      %s104 = sphi 0, %s102
      %s105 = sphi 0, %s104
      %s119 = sphi 0, %s105
      %s123 = sphi 0, %s123
      %s125 = sphi 0, %s123
      %s126 = sphi 0, %s125
      %s140 = sphi 0, %s126
      %s144 = sphi 0, %s144
      %s146 = sphi 0, %s144
      %s147 = sphi 0, %s146
      %s161 = sphi 0, %s147
      %s165 = sphi 0, %s165
      %s167 = sphi 0, %s165
      %s168 = sphi 0, %s167
      %s182 = sphi 0, %s168
      %s186 = sphi 0, %s186
      %s188 = sphi 0, %s186
      %s189 = sphi 0, %s188
      %s203 = sphi 0, %s189
      %s207 = sphi 0, %s207
      %s209 = sphi 0, %s207
      %s210 = sphi 0, %s209
      %s224 = sphi 0, %s210
      %s228 = sphi 0, %s228
      %s230 = sphi 0, %s228
      %s231 = sphi 0, %s230
      %s245 = sphi 0, %s231
      %s249 = sphi 0, %s249
      %s251 = sphi 0, %s249
      %s252 = sphi 0, %s251
      %s266 = sphi 0, %s252
      %s272 = sphi 0, %s274
      %s275 = sphi 0, %s272
      %s276 = sphi 0, %s275
      %s292 = sphi 0, %s276
    $region4: #{tpu_custom_call.1} parent=1 // loop_header_branch
      %29 = sbr.rel (%p27) target = $region8
    $region5: #{tpu_custom_call.1} parent=1 // loop_body
      %s31 = ssub.s32 %s26, 1
      %s32 = ssub.s32 %s26, 2
      %s33 = sadd.s32 %s26, 1
      %s34 = ssub.s32 %s26, %s33
      %p35 = scmp.eq.s32.totalorder %s34, 0
      %s37 = sadd.s32 %s36, 1
      %s38 = scalar_select %p35, %s36, %s37
      %p41 = pneg %p35
      %p42 = scmp.eq.s32.totalorder %s26, 1
      %p43 = por %p41, %p42
      %p44 = scmp.ne.s32.totalorder %s36, %s39
      %p45 = scmp.eq.s32.totalorder %s26, 0
      %p46 = por %p44, %p45
      %p47 = scmp.ne.s32.totalorder %s36, %s39
      %p48 = scmp.eq.s32.totalorder %s31, 1
      %p49 = por %p47, %p48
      %p50 = scmp.ne.s32.totalorder %s39, %s40
      %p51 = scmp.eq.s32.totalorder %s31, 0
      %p52 = por %p50, %p51
      %p53 = scmp.ne.s32.totalorder %s39, %s40
      %p54 = scmp.eq.s32.totalorder %s32, 1
      %p55 = por %p53, %p54
      %p57 = scmp.ne.s32.totalorder %s40, %s56
      %p58 = scmp.eq.s32.totalorder %s32, 0
      %p59 = por %p57, %p58
      %s61 = sadd.s32 %s60, 1
      %p64 = scmp.eq.s32.totalorder %s26, 1
      %p65 = scmp.ne.s32.totalorder %s60, %s62
      %p66 = scmp.eq.s32.totalorder %s26, 0
      %p67 = por %p65, %p66
      %p68 = scmp.ne.s32.totalorder %s60, %s62
      %p69 = scmp.eq.s32.totalorder %s31, 1
      %p70 = por %p68, %p69
      %p71 = scmp.ne.s32.totalorder %s62, %s63
      %p72 = scmp.eq.s32.totalorder %s31, 0
      %p73 = por %p71, %p72
      %p74 = scmp.ne.s32.totalorder %s62, %s63
      %p75 = scmp.eq.s32.totalorder %s32, 1
      %p76 = por %p74, %p75
      %p78 = scmp.ne.s32.totalorder %s63, %s77
      %p79 = scmp.eq.s32.totalorder %s32, 0
      %p80 = por %p78, %p79
      %s82 = sadd.s32 %s81, 1
      %p85 = scmp.eq.s32.totalorder %s26, 1
      %p86 = scmp.ne.s32.totalorder %s81, %s83
      %p87 = scmp.eq.s32.totalorder %s26, 0
      %p88 = por %p86, %p87
      %p89 = scmp.ne.s32.totalorder %s81, %s83
      %p90 = scmp.eq.s32.totalorder %s31, 1
      %p91 = por %p89, %p90
      %p92 = scmp.ne.s32.totalorder %s83, %s84
      %p93 = scmp.eq.s32.totalorder %s31, 0
      %p94 = por %p92, %p93
      %p95 = scmp.ne.s32.totalorder %s83, %s84
      %p96 = scmp.eq.s32.totalorder %s32, 1
      %p97 = por %p95, %p96
      %p99 = scmp.ne.s32.totalorder %s84, %s98
      %p100 = scmp.eq.s32.totalorder %s32, 0
      %p101 = por %p99, %p100
      %s103 = sadd.s32 %s102, 1
      %p106 = scmp.eq.s32.totalorder %s26, 1
      %p107 = scmp.ne.s32.totalorder %s102, %s104
      %p108 = scmp.eq.s32.totalorder %s26, 0
      %p109 = por %p107, %p108
      %p110 = scmp.ne.s32.totalorder %s102, %s104
      %p111 = scmp.eq.s32.totalorder %s31, 1
      %p112 = por %p110, %p111
      %p113 = scmp.ne.s32.totalorder %s104, %s105
      %p114 = scmp.eq.s32.totalorder %s31, 0
      %p115 = por %p113, %p114
      %p116 = scmp.ne.s32.totalorder %s104, %s105
      %p117 = scmp.eq.s32.totalorder %s32, 1
      %p118 = por %p116, %p117
      %p120 = scmp.ne.s32.totalorder %s105, %s119
      %p121 = scmp.eq.s32.totalorder %s32, 0
      %p122 = por %p120, %p121
      %s124 = sadd.s32 %s123, 1
      %p127 = scmp.eq.s32.totalorder %s26, 1
      %p128 = scmp.ne.s32.totalorder %s123, %s125
      %p129 = scmp.eq.s32.totalorder %s26, 0
      %p130 = por %p128, %p129
      %p131 = scmp.ne.s32.totalorder %s123, %s125
      %p132 = scmp.eq.s32.totalorder %s31, 1
      %p133 = por %p131, %p132
      %p134 = scmp.ne.s32.totalorder %s125, %s126
      %p135 = scmp.eq.s32.totalorder %s31, 0
      %p136 = por %p134, %p135
      %p137 = scmp.ne.s32.totalorder %s125, %s126
      %p138 = scmp.eq.s32.totalorder %s32, 1
      %p139 = por %p137, %p138
      %p141 = scmp.ne.s32.totalorder %s126, %s140
      %p142 = scmp.eq.s32.totalorder %s32, 0
      %p143 = por %p141, %p142
      %s145 = sadd.s32 %s144, 1
      %p148 = scmp.eq.s32.totalorder %s26, 1
      %p149 = scmp.ne.s32.totalorder %s144, %s146
      %p150 = scmp.eq.s32.totalorder %s26, 0
      %p151 = por %p149, %p150
      %p152 = scmp.ne.s32.totalorder %s144, %s146
      %p153 = scmp.eq.s32.totalorder %s31, 1
      %p154 = por %p152, %p153
      %p155 = scmp.ne.s32.totalorder %s146, %s147
      %p156 = scmp.eq.s32.totalorder %s31, 0
      %p157 = por %p155, %p156
      %p158 = scmp.ne.s32.totalorder %s146, %s147
      %p159 = scmp.eq.s32.totalorder %s32, 1
      %p160 = por %p158, %p159
      %p162 = scmp.ne.s32.totalorder %s147, %s161
      %p163 = scmp.eq.s32.totalorder %s32, 0
      %p164 = por %p162, %p163
      %s166 = sadd.s32 %s165, 1
      %p169 = scmp.eq.s32.totalorder %s26, 1
      %p170 = scmp.ne.s32.totalorder %s165, %s167
      %p171 = scmp.eq.s32.totalorder %s26, 0
      %p172 = por %p170, %p171
      %p173 = scmp.ne.s32.totalorder %s165, %s167
      %p174 = scmp.eq.s32.totalorder %s31, 1
      %p175 = por %p173, %p174
      %p176 = scmp.ne.s32.totalorder %s167, %s168
      %p177 = scmp.eq.s32.totalorder %s31, 0
      %p178 = por %p176, %p177
      %p179 = scmp.ne.s32.totalorder %s167, %s168
      %p180 = scmp.eq.s32.totalorder %s32, 1
      %p181 = por %p179, %p180
      %p183 = scmp.ne.s32.totalorder %s168, %s182
      %p184 = scmp.eq.s32.totalorder %s32, 0
      %p185 = por %p183, %p184
      %s187 = sadd.s32 %s186, 1
      %p190 = scmp.eq.s32.totalorder %s26, 1
      %p191 = scmp.ne.s32.totalorder %s186, %s188
      %p192 = scmp.eq.s32.totalorder %s26, 0
      %p193 = por %p191, %p192
      %p194 = scmp.ne.s32.totalorder %s186, %s188
      %p195 = scmp.eq.s32.totalorder %s31, 1
      %p196 = por %p194, %p195
      %p197 = scmp.ne.s32.totalorder %s188, %s189
      %p198 = scmp.eq.s32.totalorder %s31, 0
      %p199 = por %p197, %p198
      %p200 = scmp.ne.s32.totalorder %s188, %s189
      %p201 = scmp.eq.s32.totalorder %s32, 1
      %p202 = por %p200, %p201
      %p204 = scmp.ne.s32.totalorder %s189, %s203
      %p205 = scmp.eq.s32.totalorder %s32, 0
      %p206 = por %p204, %p205
      %s208 = sadd.s32 %s207, 1
      %p211 = scmp.eq.s32.totalorder %s26, 1
      %p212 = scmp.ne.s32.totalorder %s207, %s209
      %p213 = scmp.eq.s32.totalorder %s26, 0
      %p214 = por %p212, %p213
      %p215 = scmp.ne.s32.totalorder %s207, %s209
      %p216 = scmp.eq.s32.totalorder %s31, 1
      %p217 = por %p215, %p216
      %p218 = scmp.ne.s32.totalorder %s209, %s210
      %p219 = scmp.eq.s32.totalorder %s31, 0
      %p220 = por %p218, %p219
      %p221 = scmp.ne.s32.totalorder %s209, %s210
      %p222 = scmp.eq.s32.totalorder %s32, 1
      %p223 = por %p221, %p222
      %p225 = scmp.ne.s32.totalorder %s210, %s224
      %p226 = scmp.eq.s32.totalorder %s32, 0
      %p227 = por %p225, %p226
      %s229 = sadd.s32 %s228, 1
      %p232 = scmp.eq.s32.totalorder %s26, 1
      %p233 = scmp.ne.s32.totalorder %s228, %s230
      %p234 = scmp.eq.s32.totalorder %s26, 0
      %p235 = por %p233, %p234
      %p236 = scmp.ne.s32.totalorder %s228, %s230
      %p237 = scmp.eq.s32.totalorder %s31, 1
      %p238 = por %p236, %p237
      %p239 = scmp.ne.s32.totalorder %s230, %s231
      %p240 = scmp.eq.s32.totalorder %s31, 0
      %p241 = por %p239, %p240
      %p242 = scmp.ne.s32.totalorder %s230, %s231
      %p243 = scmp.eq.s32.totalorder %s32, 1
      %p244 = por %p242, %p243
      %p246 = scmp.ne.s32.totalorder %s231, %s245
      %p247 = scmp.eq.s32.totalorder %s32, 0
      %p248 = por %p246, %p247
      %s250 = sadd.s32 %s249, 1
      %p253 = scmp.eq.s32.totalorder %s26, 1
      %p254 = scmp.ne.s32.totalorder %s249, %s251
      %p255 = scmp.eq.s32.totalorder %s26, 0
      %p256 = por %p254, %p255
      %p257 = scmp.ne.s32.totalorder %s249, %s251
      %p258 = scmp.eq.s32.totalorder %s31, 1
      %p259 = por %p257, %p258
      %p260 = scmp.ne.s32.totalorder %s251, %s252
      %p261 = scmp.eq.s32.totalorder %s31, 0
      %p262 = por %p260, %p261
      %p263 = scmp.ne.s32.totalorder %s251, %s252
      %p264 = scmp.eq.s32.totalorder %s32, 1
      %p265 = por %p263, %p264
      %p267 = scmp.ne.s32.totalorder %s252, %s266
      %p268 = scmp.eq.s32.totalorder %s32, 0
      %p269 = por %p267, %p268
      %s270 = ssub.s32 %s26, %s33
      %p271 = scmp.eq.s32.totalorder %s270, 0
      %s273 = sadd.s32 %s272, 1
      %s274 = scalar_select %p271, %s272, %s273
      %p277 = pneg %p271
      %p278 = scmp.eq.s32.totalorder %s26, 1
      %p279 = por %p277, %p278
      %p280 = scmp.ne.s32.totalorder %s272, %s275
      %p281 = scmp.eq.s32.totalorder %s26, 0
      %p282 = por %p280, %p281
      %p283 = scmp.ne.s32.totalorder %s272, %s275
      %p284 = scmp.eq.s32.totalorder %s31, 1
      %p285 = por %p283, %p284
      %p286 = scmp.ne.s32.totalorder %s275, %s276
      %p287 = scmp.eq.s32.totalorder %s31, 0
      %p288 = por %p286, %p287
      %p289 = scmp.ne.s32.totalorder %s275, %s276
      %p290 = scmp.eq.s32.totalorder %s32, 1
      %p291 = por %p289, %p290
      %p293 = scmp.ne.s32.totalorder %s276, %s292
      %p294 = scmp.eq.s32.totalorder %s32, 0
      %p295 = por %p293, %p294
      %p296 = scmp.le.s32.totalorder 1, %s26
      %p297 = scmp.lt.s32.totalorder %s26, 3
      %p298 = pnand %p296, %p297
      %p299 = pneg %p298
      // Predicated region
      $region9: #{tpu_custom_call.1} parent=5 // pred_check
        _
      $region10: #{tpu_custom_call.1} parent=5 // pred_check_branch
        %301 = sbr.rel (%p298) target = $region12
      $region11: #{tpu_custom_call.1} parent=5 // pred_region
        %s302 = ssub.s32 %s26, 1
        // Predicated region
        $region13: #{tpu_custom_call.1} parent=11 // pred_check
          %p303 = pneg %p73
        $region14: #{tpu_custom_call.1} parent=11 // pred_check_branch
          %305 = sbr.rel (%p303) target = $region16
        $region15: #{tpu_custom_call.1} parent=11 // pred_region
          %s307 = ssub.s32 256, 256
          %308 = vsyncadd [#allocation6], %s307
          %s309 = sshll.u32 [#allocation5], 4
          %s310 = int_to_ptr.vmem [resolvable:$true] %s309
          %315 = dma.hbm_to_vmem [thread:$0]  %s1, 256, %s310, [#allocation6], 64, 64, 4
        $region16: #{tpu_custom_call.1} parent=11 // pred_fallthru
          _
        // Predicated region
        $region17: #{tpu_custom_call.1} parent=11 // pred_check
          %p316 = pneg %p94
        $region18: #{tpu_custom_call.1} parent=11 // pred_check_branch
          %318 = sbr.rel (%p316) target = $region20
        $region19: #{tpu_custom_call.1} parent=11 // pred_region
          %s320 = ssub.s32 64, 64
          %321 = vsyncadd [#allocation6], %s320
          %s323 = sshll.u32 [#allocation7], 4
          %s324 = int_to_ptr.vmem [resolvable:$true] %s323
          %326 = dma.hbm_to_vmem [thread:$0]  %s2, 64, %s324, [#allocation6]
        $region20: #{tpu_custom_call.1} parent=11 // pred_fallthru
          _
        // Predicated region
        $region21: #{tpu_custom_call.1} parent=11 // pred_check
          %p327 = pneg %p115
        $region22: #{tpu_custom_call.1} parent=11 // pred_check_branch
          %329 = sbr.rel (%p327) target = $region24
        $region23: #{tpu_custom_call.1} parent=11 // pred_region
          _
        $region24: #{tpu_custom_call.1} parent=11 // pred_fallthru
          _
        // Predicated region
        $region25: #{tpu_custom_call.1} parent=11 // pred_check
          %p330 = pneg %p136
        $region26: #{tpu_custom_call.1} parent=11 // pred_check_branch
          %332 = sbr.rel (%p330) target = $region28
        $region27: #{tpu_custom_call.1} parent=11 // pred_region
          %s334 = ssub.s32 1024, 1024
          %335 = vsyncadd [#allocation9], %s334
          %s336 = sshll.u32 [#allocation8], 4
          %s337 = int_to_ptr.vmem [resolvable:$true] %s336
          %342 = dma.hbm_to_vmem [thread:$0]  %s4, 1024, %s337, [#allocation9], 128, 128, 8
        $region28: #{tpu_custom_call.1} parent=11 // pred_fallthru
          _
        // Predicated region
        $region29: #{tpu_custom_call.1} parent=11 // pred_check
          %p343 = pneg %p157
        $region30: #{tpu_custom_call.1} parent=11 // pred_check_branch
          %345 = sbr.rel (%p343) target = $region32
        $region31: #{tpu_custom_call.1} parent=11 // pred_region
          _
        $region32: #{tpu_custom_call.1} parent=11 // pred_fallthru
          _
        // Predicated region
        $region33: #{tpu_custom_call.1} parent=11 // pred_check
          %p346 = pneg %p178
        $region34: #{tpu_custom_call.1} parent=11 // pred_check_branch
          %348 = sbr.rel (%p346) target = $region36
        $region35: #{tpu_custom_call.1} parent=11 // pred_region
          _
        $region36: #{tpu_custom_call.1} parent=11 // pred_fallthru
          _
        // Predicated region
        $region37: #{tpu_custom_call.1} parent=11 // pred_check
          %p349 = pneg %p199
        $region38: #{tpu_custom_call.1} parent=11 // pred_check_branch
          %351 = sbr.rel (%p349) target = $region40
        $region39: #{tpu_custom_call.1} parent=11 // pred_region
          %s353 = ssub.s32 512, 512
          %354 = vsyncadd [#allocation9], %s353
          %s355 = sshll.u32 [#allocation10], 4
          %s356 = int_to_ptr.vmem [resolvable:$true] %s355
          %361 = dma.hbm_to_vmem [thread:$0]  %s7, 512, %s356, [#allocation9], 64, 64, 4
        $region40: #{tpu_custom_call.1} parent=11 // pred_fallthru
          _
        // Predicated region
        $region41: #{tpu_custom_call.1} parent=11 // pred_check
          %p362 = pneg %p220
        $region42: #{tpu_custom_call.1} parent=11 // pred_check_branch
          %364 = sbr.rel (%p362) target = $region44
        $region43: #{tpu_custom_call.1} parent=11 // pred_region
          %s366 = ssub.s32 256, 256
          %367 = vsyncadd [#allocation12], %s366
          %s368 = sshll.u32 [#allocation11], 4
          %s369 = int_to_ptr.vmem [resolvable:$true] %s368
          %374 = dma.hbm_to_vmem [thread:$0]  %s8, 256, %s369, [#allocation12], 128, 128, 8
        $region44: #{tpu_custom_call.1} parent=11 // pred_fallthru
          _
        // Predicated region
        $region45: #{tpu_custom_call.1} parent=11 // pred_check
          %p375 = pneg %p241
        $region46: #{tpu_custom_call.1} parent=11 // pred_check_branch
          %377 = sbr.rel (%p375) target = $region48
        $region47: #{tpu_custom_call.1} parent=11 // pred_region
          _
        $region48: #{tpu_custom_call.1} parent=11 // pred_fallthru
          _
        // Predicated region
        $region49: #{tpu_custom_call.1} parent=11 // pred_check
          %p378 = pneg %p262
        $region50: #{tpu_custom_call.1} parent=11 // pred_check_branch
          %380 = sbr.rel (%p378) target = $region52
        $region51: #{tpu_custom_call.1} parent=11 // pred_region
          %s382 = ssub.s32 512, 512
          %383 = vsyncadd [#allocation12], %s382
          %s384 = sshll.u32 [#allocation13], 4
          %s385 = int_to_ptr.vmem [resolvable:$true] %s384
          %390 = dma.hbm_to_vmem [thread:$0]  %s10, 512, %s385, [#allocation12], 64, 64, 4
        $region52: #{tpu_custom_call.1} parent=11 // pred_fallthru
          _
      $region12: #{tpu_custom_call.1} parent=5 // pred_fallthru
        _
      %p391 = scmp.lt.s32.totalorder %s26, 2
      // Predicated region
      $region53: #{tpu_custom_call.1} parent=5 // pred_check
        %p392 = pneg %p391
      $region54: #{tpu_custom_call.1} parent=5 // pred_check_branch
        %394 = sbr.rel (%p392) target = $region56
      $region55: #{tpu_custom_call.1} parent=5 // pred_region
        // Predicated region
        $region57: #{tpu_custom_call.1} parent=55 // pred_check
          %p395 = pneg %p46
        $region58: #{tpu_custom_call.1} parent=55 // pred_check_branch
          %397 = sbr.rel (%p395) target = $region60
        $region59: #{tpu_custom_call.1} parent=55 // pred_region
          %s398 = sand.u32 %s36, 1
          %s399 = scalar_lea.sflag [#allocation3], %s398
          %s400 = sand.u32 %s36, 1
          %s401 = smul.addr %s400, 8
          %s402 = scalar_lea.vmem [#allocation2], %s401
          %s404 = ssub.s32 128, 128
          %405 = vsyncadd %s399, %s404
          %s406 = smul.addr %s26, 128
          %s407 = scalar_lea.hbm %s0, %s406
          %s409 = sshll.u32 %s402, 4
          %s410 = int_to_ptr.vmem [resolvable:$true] %s409
          %412 = dma.hbm_to_vmem [thread:$0]  %s407, 128, %s410, %s399
        $region60: #{tpu_custom_call.1} parent=55 // pred_fallthru
          _
      $region56: #{tpu_custom_call.1} parent=5 // pred_fallthru
        _
      %p413 = scmp.le.s32.totalorder 1, %s26
      %p414 = scmp.lt.s32.totalorder %s26, 3
      %p415 = pnand %p413, %p414
      %p416 = pneg %p415
      // Predicated region
      $region61: #{tpu_custom_call.1} parent=5 // pred_check
        _
      $region62: #{tpu_custom_call.1} parent=5 // pred_check_branch
        %418 = sbr.rel (%p415) target = $region64
      $region63: #{tpu_custom_call.1} parent=5 // pred_region
        %s419 = ssub.s32 %s26, 1
        %s420 = sand.u32 %s39, 1
        %s421 = scalar_lea.sflag [#allocation3], %s420
        %s422 = sand.u32 %s39, 1
        %s423 = smul.addr %s422, 8
        %s424 = scalar_lea.vmem [#allocation2], %s423
        // Predicated region
        $region65: #{tpu_custom_call.1} parent=63 // pred_check
          %p425 = pneg %p52
        $region66: #{tpu_custom_call.1} parent=63 // pred_check_branch
          %427 = sbr.rel (%p425) target = $region68
        $region67: #{tpu_custom_call.1} parent=63 // pred_region
          %428 = dma.done %s421, 128
        $region68: #{tpu_custom_call.1} parent=63 // pred_fallthru
          _
        // Predicated region
        $region69: #{tpu_custom_call.1} parent=63 // pred_check
          %p429 = pneg %p73
        $region70: #{tpu_custom_call.1} parent=63 // pred_check_branch
          %431 = sbr.rel (%p429) target = $region72
        $region71: #{tpu_custom_call.1} parent=63 // pred_region
          %432 = dma.done [#allocation6], 256
        $region72: #{tpu_custom_call.1} parent=63 // pred_fallthru
          _
        // Predicated region
        $region73: #{tpu_custom_call.1} parent=63 // pred_check
          %p433 = pneg %p94
        $region74: #{tpu_custom_call.1} parent=63 // pred_check_branch
          %435 = sbr.rel (%p433) target = $region76
        $region75: #{tpu_custom_call.1} parent=63 // pred_region
          %436 = dma.done [#allocation6], 64
        $region76: #{tpu_custom_call.1} parent=63 // pred_fallthru
          _
        // Predicated region
        $region77: #{tpu_custom_call.1} parent=63 // pred_check
          %p437 = pneg %p136
        $region78: #{tpu_custom_call.1} parent=63 // pred_check_branch
          %439 = sbr.rel (%p437) target = $region80
        $region79: #{tpu_custom_call.1} parent=63 // pred_region
          %440 = dma.done [#allocation9], 1024
        $region80: #{tpu_custom_call.1} parent=63 // pred_fallthru
          _
        // Predicated region
        $region81: #{tpu_custom_call.1} parent=63 // pred_check
          %p441 = pneg %p199
        $region82: #{tpu_custom_call.1} parent=63 // pred_check_branch
          %443 = sbr.rel (%p441) target = $region84
        $region83: #{tpu_custom_call.1} parent=63 // pred_region
          %444 = dma.done [#allocation9], 512
        $region84: #{tpu_custom_call.1} parent=63 // pred_fallthru
          _
        // Predicated region
        $region85: #{tpu_custom_call.1} parent=63 // pred_check
          %p445 = pneg %p220
        $region86: #{tpu_custom_call.1} parent=63 // pred_check_branch
          %447 = sbr.rel (%p445) target = $region88
        $region87: #{tpu_custom_call.1} parent=63 // pred_region
          %448 = dma.done [#allocation12], 256
        $region88: #{tpu_custom_call.1} parent=63 // pred_fallthru
          _
        // Predicated region
        $region89: #{tpu_custom_call.1} parent=63 // pred_check
          %p449 = pneg %p262
        $region90: #{tpu_custom_call.1} parent=63 // pred_check_branch
          %451 = sbr.rel (%p449) target = $region92
        $region91: #{tpu_custom_call.1} parent=63 // pred_region
          %452 = dma.done [#allocation12], 512
        $region92: #{tpu_custom_call.1} parent=63 // pred_fallthru
          _
        %s453 = sand.u32 %s39, 1
        %s454 = scalar_lea.sflag [#allocation3], %s453
        %s455 = sand.u32 %s39, 1
        %s456 = smul.addr %s455, 8
        %s457 = scalar_lea.vmem [#allocation2], %s456
        %p458 = pneg %p52
        %p459 = pneg %p49
        %p460 = pneg %p73
        %p461 = pneg %p70
        %p462 = pneg %p94
        %p463 = pneg %p91
        %p464 = pneg %p115
        %p465 = pneg %p112
        %p466 = pneg %p136
        %p467 = pneg %p133
        %p468 = pneg %p157
        %p469 = pneg %p154
        %p470 = pneg %p178
        %p471 = pneg %p175
        %p472 = pneg %p199
        %p473 = pneg %p196
        %p474 = pneg %p220
        %p475 = pneg %p217
        %p476 = pneg %p241
        %p477 = pneg %p238
        %p478 = pneg %p262
        %p479 = pneg %p259
        %p480 = pneg %p288
        %p481 = pneg %p285
        %s482 = sand.u32 %s275, 1
        %s483 = scalar_lea.sflag [#allocation4], %s482
        %s484 = sand.u32 %s275, 1
        %s485 = smul.addr %s484, 8
        %s486 = scalar_lea.vmem [#allocation14], %s485
        %v488 = vld [vmem:[%s424] sm:$0xff]
        %v489 = vpack.c.bf16 %v488, %v488
        %v490 = vld [vmem:[#allocation5] sm:$0xf]
        %v491 = vld [vmem:[#allocation5 + $0x4] sm:$0xf]
        %v492 = vld [vmem:[#allocation5 + $0x8] sm:$0xf]
        %v493 = vld [vmem:[#allocation5 + $0xc] sm:$0xf]
        %v498 = vunpack.c.l.b16 %v490
        %v499 = vunpack.c.l.b16 %v491
        %v500 = vunpack.c.l.b16 %v492
        %v501 = vunpack.c.l.b16 %v493
        %v502 = vpack.c.b16 %v499, %v498
        %v503 = vpack.c.b16 %v501, %v500
        %vm506 = vcmask 261120
        %v508 = vsel %vm506, %v489, 0
        %510 = vmatprep.subr.bf16.mxu0 0
        %511 = vmatpush1.bf16.msra.mxu0 0
        %512 = vmatprep.subr.bf16.mxu0 0
        %513 = vmatpush1.bf16.msra.mxu0 0
        %514 = vmatprep.subr.bf16.mxu0 0
        %515 = vmatpush1.bf16.msra.mxu0 0
        %516 = vmatprep.subr.bf16.mxu0 0
        %517 = vmatpush1.bf16.msra.mxu0 0
        %518 = vmatprep.subr.bf16.mxu0 0
        %519 = vmatpush1.bf16.msra.mxu0 0
        %520 = vmatprep.subr.bf16.mxu0 0
        %521 = vmatpush1.bf16.msra.mxu0 0
        %522 = vmatprep.subr.bf16.mxu0 0
        %523 = vmatpush1.bf16.msra.mxu0 %v503
        %524 = vmatprep.subr.bf16.mxu0 0
        %525 = vmatpush1.bf16.msra.mxu0 %v502
        %526 = vmatprep.subr.bf16.mxu0 0
        %527 = vmatpush2.bf16.msra.mxu0 0
        %528 = vmatprep.subr.bf16.mxu0 0
        %529 = vmatpush2.bf16.msra.mxu0 0
        %530 = vmatprep.subr.bf16.mxu0 0
        %531 = vmatpush2.bf16.msra.mxu0 0
        %532 = vmatprep.subr.bf16.mxu0 0
        %533 = vmatpush2.bf16.msra.mxu0 0
        %534 = vmatprep.subr.bf16.mxu0 0
        %535 = vmatpush2.bf16.msra.mxu0 0
        %536 = vmatprep.subr.bf16.mxu0 0
        %537 = vmatpush2.bf16.msra.mxu0 0
        %538 = vmatprep.subr.bf16.mxu0 0
        %539 = vmatpush2.bf16.msra.mxu0 0
        %540 = vmatprep.subr.bf16.mxu0 0
        %541 = vmatpush2.bf16.msra.mxu0 0
        %542 = vmatprep.mubr.bf16.mxu0 0
        %543 = vmatmul.mubr.bf16.gmra.mxu0 %v508
        %v544 = vpop.f32.mrf.mxu0
        %v545 = vadd.f32 0.0, %v544
        %v546 = vpop.f32.mrf.mxu0
        %v547 = vpop.f32.mrf.mxu0
        %v548 = vpop.f32.mrf.mxu0
        %549 = vdwg.mxu0
        %v550 = vld [vmem:[#allocation7] sm:$0xf]
        %v551 = vlaneseq
        %v552 = vshrl.u32 %v551, 7
        %v553 = vsub.s32 3, %v552
        %v554 = vrot.slane %v550, %v553
        %v555 = vmul.f32 %v545, %v554
        %v556 = vld [vmem:[%s3] sm:$0x1]
        %v558 = vlaneseq
        %v559 = vshrl.u32 %v558, 7
        %v560 = vsub.s32 0, %v559
        %v561 = vrot.slane %v556, %v560
        %v563 = vadd.f32 %v555, %v561
        %v564 = vlaneseq
        %v565 = vshrl.u32 %v564, 7
        %v566 = vsub.s32 0, %v565
        %v567 = vrot.slane %v550, %v566
        %v568 = vmul.f32 %v567, 0.0
        %v569 = vmul.f32 %v545, %v567
        %vm572 = vcmask 1042432
        %v573 = vrot.slane %v568, 5
        %v574 = vrot.slane %v569, 5
        %v575 = vsel %vm572, %v573, %v574
        %v577 = vadd.f32 %v563, %v575
        %v578 = vlaneseq
        %v579 = vshrl.u32 %v578, 7
        %v580 = vsub.s32 1, %v579
        %v581 = vrot.slane %v550, %v580
        %v582 = vmul.f32 %v581, 0.0
        %v583 = vmul.f32 %v545, %v581
        %vm586 = vcmask 1041408
        %v587 = vrot.slane %v582, 6
        %v588 = vrot.slane %v583, 6
        %v589 = vsel %vm586, %v587, %v588
        %v591 = vadd.f32 %v577, %v589
        %v592 = vlaneseq
        %v593 = vshrl.u32 %v592, 7
        %v594 = vsub.s32 2, %v593
        %v595 = vrot.slane %v550, %v594
        %v596 = vmul.f32 %v595, 0.0
        %v597 = vmul.f32 %v545, %v595
        %vm600 = vcmask 1040384
        %v601 = vrot.slane %v596, 7
        %v602 = vrot.slane %v597, 7
        %v603 = vsel %vm600, %v601, %v602
        %v605 = vadd.f32 %v591, %v603
        %v606 = vmul.f32 %v605, 0.5
        %v607 = vtanh.pop %v606
        %v608 = vadd.f32 %v607, 1.0
        %v609 = vmul.f32 %v608, 0.5
        %v610 = vmul.f32 %v605, %v609
        %v611 = vpack.c.bf16 %v610, %v610
        %v612 = vld [vmem:[#allocation8] sm:$0xff]
        %v613 = vld [vmem:[#allocation8 + $0x8] sm:$0xff]
        %v614 = vld [vmem:[#allocation8 + $0x10] sm:$0xff]
        %v615 = vld [vmem:[#allocation8 + $0x18] sm:$0xff]
        %v616 = vld [vmem:[#allocation8 + $0x20] sm:$0xff]
        %v617 = vld [vmem:[#allocation8 + $0x28] sm:$0xff]
        %v618 = vld [vmem:[#allocation8 + $0x30] sm:$0xff]
        %v619 = vld [vmem:[#allocation8 + $0x38] sm:$0xff]
        %v620 = vld [vmem:[%s5] sm:$0x1]
        %v622 = vlaneseq
        %v623 = vshrl.u32 %v622, 7
        %v624 = vsub.s32 0, %v623
        %v625 = vrot.slane %v620, %v624
        %vm627 = vcmask 523264
        %v629 = vsel %vm627, %v610, 0
        %631 = vmatprep.subr.mxu0 0.0
        %632 = vmatpush1.msra.mxu0 0.0
        %633 = vmatprep.subr.mxu0 0.0
        %634 = vmatpush1.msra.mxu0 0.0
        %635 = vmatprep.subr.mxu0 0.0
        %636 = vmatpush1.msra.mxu0 0.0
        %637 = vmatprep.subr.mxu0 0.0
        %638 = vmatpush1.msra.mxu0 0.0
        %639 = vmatprep.subr.mxu0 0.0
        %640 = vmatpush1.msra.mxu0 0.0
        %641 = vmatprep.subr.mxu0 0.0
        %642 = vmatpush1.msra.mxu0 0.0
        %643 = vmatprep.subr.mxu0 0.0
        %644 = vmatpush1.msra.mxu0 0.0
        %645 = vmatprep.subr.mxu0 0.0
        %646 = vmatpush1.msra.mxu0 0.0
        %647 = vmatprep.subr.mxu0 0.0
        %648 = vmatpush1.msra.mxu0 %v619
        %649 = vmatprep.subr.mxu0 0.0
        %650 = vmatpush1.msra.mxu0 %v618
        %651 = vmatprep.subr.mxu0 0.0
        %652 = vmatpush1.msra.mxu0 %v617
        %653 = vmatprep.subr.mxu0 0.0
        %654 = vmatpush1.msra.mxu0 %v616
        %655 = vmatprep.subr.mxu0 0.0
        %656 = vmatpush1.msra.mxu0 %v615
        %657 = vmatprep.subr.mxu0 0.0
        %658 = vmatpush1.msra.mxu0 %v614
        %659 = vmatprep.subr.mxu0 0.0
        %660 = vmatpush1.msra.mxu0 %v613
        %661 = vmatprep.subr.mxu0 0.0
        %662 = vmatpush1.msra.mxu0 %v612
        %663 = vmatprep.subr.mxu0 0.0
        %664 = vmatpush2.msra.mxu0 0.0
        %665 = vmatprep.subr.mxu0 0.0
        %666 = vmatpush2.msra.mxu0 0.0
        %667 = vmatprep.subr.mxu0 0.0
        %668 = vmatpush2.msra.mxu0 0.0
        %669 = vmatprep.subr.mxu0 0.0
        %670 = vmatpush2.msra.mxu0 0.0
        %671 = vmatprep.subr.mxu0 0.0
        %672 = vmatpush2.msra.mxu0 0.0
        %673 = vmatprep.subr.mxu0 0.0
        %674 = vmatpush2.msra.mxu0 0.0
        %675 = vmatprep.subr.mxu0 0.0
        %676 = vmatpush2.msra.mxu0 0.0
        %677 = vmatprep.subr.mxu0 0.0
        %678 = vmatpush2.msra.mxu0 0.0
        %679 = vmatprep.subr.mxu0 0.0
        %680 = vmatpush2.msra.mxu0 0.0
        %681 = vmatprep.subr.mxu0 0.0
        %682 = vmatpush2.msra.mxu0 0.0
        %683 = vmatprep.subr.mxu0 0.0
        %684 = vmatpush2.msra.mxu0 0.0
        %685 = vmatprep.subr.mxu0 0.0
        %686 = vmatpush2.msra.mxu0 0.0
        %687 = vmatprep.subr.mxu0 0.0
        %688 = vmatpush2.msra.mxu0 0.0
        %689 = vmatprep.subr.mxu0 0.0
        %690 = vmatpush2.msra.mxu0 0.0
        %691 = vmatprep.subr.mxu0 0.0
        %692 = vmatpush2.msra.mxu0 0.0
        %693 = vmatprep.subr.mxu0 0.0
        %694 = vmatpush2.msra.mxu0 0.0
        %695 = vmatprep.mubr.f32.mxu0 0.0
        %696 = vmatmul.mubr.f32.gmra.mxu0 %v629
        %v697 = vpop.f32.mrf.mxu0
        %v698 = vadd.f32 %v625, %v697
        %v699 = vpop.f32.mrf.mxu0
        %700 = vdwg.mxu0
        %v701 = vmax.f32 %v698, 0.0
        %v702 = vand.u32 2147483647, %v698
        %v703 = vsub.f32 0.0, %v702
        %v704 = vmul.f32 %v703, 1.442695
        %v705 = vpow.pop %v704
        %v706 = vadd.f32 %v705, 1.0
        %v707 = vlog2.pop %v706
        %v708 = vmul.f32 %v707, 0.6931472
        %v709 = vadd.f32 %v701, %v708
        %v710 = vld [vmem:[%s6] sm:$0xf]
        %v711 = vld [vmem:[%s6 + $0x4] sm:$0xf]
        %v714 = vunpack.c.l.b16 %v710
        %v715 = vunpack.c.l.b16 %v711
        %v716 = vpack.c.b16 %v715, %v714
        %v718 = vsel %vm627, %v716, 0
        %v721 = vsel %vm627, %v611, 0
        %723 = vmatprep.subr.bf16.mxu0 0
        %724 = vmatpush1.bf16.xpose.msra.mxu0 0
        %725 = vmatprep.subr.bf16.mxu0 0
        %726 = vmatpush1.bf16.xpose.msra.mxu0 0
        %727 = vmatprep.subr.bf16.mxu0 0
        %728 = vmatpush1.bf16.xpose.msra.mxu0 0
        %729 = vmatprep.subr.bf16.mxu0 0
        %730 = vmatpush1.bf16.xpose.msra.mxu0 0
        %731 = vmatprep.subr.bf16.mxu0 0
        %732 = vmatpush1.bf16.xpose.msra.mxu0 0
        %733 = vmatprep.subr.bf16.mxu0 0
        %734 = vmatpush1.bf16.xpose.msra.mxu0 0
        %735 = vmatprep.subr.bf16.mxu0 0
        %736 = vmatpush1.bf16.xpose.msra.mxu0 0
        %737 = vmatprep.subr.bf16.mxu0 0
        %738 = vmatpush1.bf16.xpose.msra.mxu0 %v721
        %739 = vmatprep.subr.bf16.mxu0 0
        %740 = vmatpush2.bf16.xpose.msra.mxu0 0
        %741 = vmatprep.subr.bf16.mxu0 0
        %742 = vmatpush2.bf16.xpose.msra.mxu0 0
        %743 = vmatprep.subr.bf16.mxu0 0
        %744 = vmatpush2.bf16.xpose.msra.mxu0 0
        %745 = vmatprep.subr.bf16.mxu0 0
        %746 = vmatpush2.bf16.xpose.msra.mxu0 0
        %747 = vmatprep.subr.bf16.mxu0 0
        %748 = vmatpush2.bf16.xpose.msra.mxu0 0
        %749 = vmatprep.subr.bf16.mxu0 0
        %750 = vmatpush2.bf16.xpose.msra.mxu0 0
        %751 = vmatprep.subr.bf16.mxu0 0
        %752 = vmatpush2.bf16.xpose.msra.mxu0 0
        %753 = vmatprep.subr.bf16.mxu0 0
        %754 = vmatpush2.bf16.xpose.msra.mxu0 0
        %755 = vmatprep.mubr.bf16.mxu0 0
        %756 = vmatmul.mubr.bf16.gmra.mxu0 %v718
        %v757 = vpop.f32.mrf.mxu0
        %v758 = vadd.f32 0.0, %v757
        %v759 = vpop.f32.mrf.mxu0
        %v760 = vpop.f32.mrf.mxu0
        %v761 = vadd.f32 0.0, %v760
        %v762 = vpop.f32.mrf.mxu0
        %763 = vdwg.mxu0
        %v764 = vld [vmem:[#allocation10] sm:$0xf]
        %v765 = vld [vmem:[#allocation10 + $0x4] sm:$0xf]
        %v766 = vld [vmem:[#allocation10 + $0x8] sm:$0xf]
        %v767 = vld [vmem:[#allocation10 + $0xc] sm:$0xf]
        %v768 = vld [vmem:[#allocation10 + $0x10] sm:$0xf]
        %v769 = vld [vmem:[#allocation10 + $0x14] sm:$0xf]
        %v770 = vld [vmem:[#allocation10 + $0x18] sm:$0xf]
        %v771 = vld [vmem:[#allocation10 + $0x1c] sm:$0xf]
        %v780 = vunpack.c.l.b16 %v764
        %v781 = vunpack.c.l.b16 %v765
        %v782 = vunpack.c.l.b16 %v766
        %v783 = vunpack.c.l.b16 %v767
        %v784 = vunpack.c.l.b16 %v768
        %v785 = vunpack.c.l.b16 %v769
        %v786 = vunpack.c.l.b16 %v770
        %v787 = vunpack.c.l.b16 %v771
        %v788 = vpack.c.b16 %v781, %v780
        %v789 = vpack.c.b16 %v783, %v782
        %v790 = vpack.c.b16 %v785, %v784
        %v791 = vpack.c.b16 %v787, %v786
        %796 = vmatprep.subr.bf16.mxu0 0
        %797 = vmatpush1.bf16.msra.mxu0 0
        %798 = vmatprep.subr.bf16.mxu0 0
        %799 = vmatpush1.bf16.msra.mxu0 0
        %800 = vmatprep.subr.bf16.mxu0 0
        %801 = vmatpush1.bf16.msra.mxu0 0
        %802 = vmatprep.subr.bf16.mxu0 0
        %803 = vmatpush1.bf16.msra.mxu0 0
        %804 = vmatprep.subr.bf16.mxu0 0
        %805 = vmatpush1.bf16.msra.mxu0 %v791
        %806 = vmatprep.subr.bf16.mxu0 0
        %807 = vmatpush1.bf16.msra.mxu0 %v790
        %808 = vmatprep.subr.bf16.mxu0 0
        %809 = vmatpush1.bf16.msra.mxu0 %v789
        %810 = vmatprep.subr.bf16.mxu0 0
        %811 = vmatpush1.bf16.msra.mxu0 %v788
        %812 = vmatprep.subr.bf16.mxu0 0
        %813 = vmatpush2.bf16.msra.mxu0 0
        %814 = vmatprep.subr.bf16.mxu0 0
        %815 = vmatpush2.bf16.msra.mxu0 0
        %816 = vmatprep.subr.bf16.mxu0 0
        %817 = vmatpush2.bf16.msra.mxu0 0
        %818 = vmatprep.subr.bf16.mxu0 0
        %819 = vmatpush2.bf16.msra.mxu0 0
        %820 = vmatprep.subr.bf16.mxu0 0
        %821 = vmatpush2.bf16.msra.mxu0 0
        %822 = vmatprep.subr.bf16.mxu0 0
        %823 = vmatpush2.bf16.msra.mxu0 0
        %824 = vmatprep.subr.bf16.mxu0 0
        %825 = vmatpush2.bf16.msra.mxu0 0
        %826 = vmatprep.subr.bf16.mxu0 0
        %827 = vmatpush2.bf16.msra.mxu0 0
        %828 = vmatprep.mubr.bf16.mxu0 0
        %829 = vmatmul.mubr.bf16.gmra.mxu0 %v721
        %v830 = vpop.f32.mrf.mxu0
        %v831 = vadd.f32 0.0, %v830
        %v832 = vpop.f32.mrf.mxu0
        %v833 = vpop.f32.mrf.mxu0
        %v834 = vpop.f32.mrf.mxu0
        %835 = vdwg.mxu0
        %v836 = vld [vmem:[#allocation11] sm:$0xff]
        %v837 = vld [vmem:[#allocation11 + $0x8] sm:$0xff]
        %v838 = vmul.f32 %v709, %v610
        %v839 = vlaneseq
        %v840 = vshrl.u32 %v839, 7
        %v841 = vsub.s32 0, %v840
        %v842 = vrot.slane %v709, %v841
        %v843 = vmul.f32 %v842, %v836
        %v844 = vmul.f32 %v842, %v837
        %v845 = vmul.f32 %v843, 1.442695
        %v846 = vpow.pop %v845
        %v847 = vmul.f32 %v844, 1.442695
        %v848 = vpow.pop %v847
        %v849 = vlaneseq
        %v850 = vshrl.u32 %v849, 7
        %v851 = vsub.s32 1, %v850
        %v852 = vrot.slane %v709, %v851
        %v853 = vmul.f32 %v852, %v836
        %v854 = vmul.f32 %v852, %v837
        %v855 = vmul.f32 %v853, 1.442695
        %v856 = vpow.pop %v855
        %v857 = vmul.f32 %v854, 1.442695
        %v858 = vpow.pop %v857
        %v859 = vlaneseq
        %v860 = vshrl.u32 %v859, 7
        %v861 = vsub.s32 2, %v860
        %v862 = vrot.slane %v709, %v861
        %v863 = vmul.f32 %v862, %v836
        %v864 = vmul.f32 %v862, %v837
        %v865 = vmul.f32 %v863, 1.442695
        %v866 = vpow.pop %v865
        %v867 = vmul.f32 %v864, 1.442695
        %v868 = vpow.pop %v867
        %v869 = vlaneseq
        %v870 = vshrl.u32 %v869, 7
        %v871 = vsub.s32 3, %v870
        %v872 = vrot.slane %v709, %v871
        %v873 = vmul.f32 %v872, %v836
        %v874 = vmul.f32 %v872, %v837
        %v875 = vmul.f32 %v873, 1.442695
        %v876 = vpow.pop %v875
        %v877 = vmul.f32 %v874, 1.442695
        %v878 = vpow.pop %v877
        %v879 = vlaneseq
        %v880 = vshrl.u32 %v879, 7
        %v881 = vsub.s32 4, %v880
        %v882 = vrot.slane %v709, %v881
        %v883 = vmul.f32 %v882, %v836
        %v884 = vmul.f32 %v882, %v837
        %v885 = vmul.f32 %v883, 1.442695
        %v886 = vpow.pop %v885
        %v887 = vmul.f32 %v884, 1.442695
        %v888 = vpow.pop %v887
        %v889 = vlaneseq
        %v890 = vshrl.u32 %v889, 7
        %v891 = vsub.s32 5, %v890
        %v892 = vrot.slane %v709, %v891
        %v893 = vmul.f32 %v892, %v836
        %v894 = vmul.f32 %v892, %v837
        %v895 = vmul.f32 %v893, 1.442695
        %v896 = vpow.pop %v895
        %v897 = vmul.f32 %v894, 1.442695
        %v898 = vpow.pop %v897
        %v899 = vlaneseq
        %v900 = vshrl.u32 %v899, 7
        %v901 = vsub.s32 6, %v900
        %v902 = vrot.slane %v709, %v901
        %v903 = vmul.f32 %v902, %v836
        %v904 = vmul.f32 %v902, %v837
        %v905 = vmul.f32 %v903, 1.442695
        %v906 = vpow.pop %v905
        %v907 = vmul.f32 %v904, 1.442695
        %v908 = vpow.pop %v907
        %v909 = vlaneseq
        %v910 = vshrl.u32 %v909, 7
        %v911 = vsub.s32 7, %v910
        %v912 = vrot.slane %v709, %v911
        %v913 = vmul.f32 %v912, %v836
        %v914 = vmul.f32 %v912, %v837
        %v915 = vmul.f32 %v913, 1.442695
        %v916 = vpow.pop %v915
        %v917 = vmul.f32 %v914, 1.442695
        %v918 = vpow.pop %v917
        %v919 = vlaneseq
        %v920 = vshrl.u32 %v919, 7
        %v921 = vsub.s32 0, %v920
        %v922 = vrot.slane %v838, %v921
        %924 = vset.pattern.permute.xlu0 0
        %925 = vperm.xlu0 %924, %v758
        %v926 = vpop.permute.xlu0 %925
        %929 = vset.pattern.permute.xlu0 0
        %930 = vperm.xlu0 %929, %v761
        %v931 = vpop.permute.xlu0 %930
        %v933 = vmul.f32 %v922, %v926
        %v934 = vmul.f32 %v922, %v931
        %v935 = vlaneseq
        %v936 = vshrl.u32 %v935, 7
        %v937 = vsub.s32 1, %v936
        %v938 = vrot.slane %v838, %v937
        %939 = vset.pattern.permute.xlu0 1
        %940 = vperm.xlu0 %939, %v758
        %v941 = vpop.permute.xlu0 %940
        %943 = vset.pattern.permute.xlu0 1
        %944 = vperm.xlu0 %943, %v761
        %v945 = vpop.permute.xlu0 %944
        %v947 = vmul.f32 %v938, %v941
        %v948 = vmul.f32 %v938, %v945
        %v949 = vlaneseq
        %v950 = vshrl.u32 %v949, 7
        %v951 = vsub.s32 2, %v950
        %v952 = vrot.slane %v838, %v951
        %953 = vset.pattern.permute.xlu0 2
        %954 = vperm.xlu0 %953, %v758
        %v955 = vpop.permute.xlu0 %954
        %957 = vset.pattern.permute.xlu0 2
        %958 = vperm.xlu0 %957, %v761
        %v959 = vpop.permute.xlu0 %958
        %v961 = vmul.f32 %v952, %v955
        %v962 = vmul.f32 %v952, %v959
        %v963 = vlaneseq
        %v964 = vshrl.u32 %v963, 7
        %v965 = vsub.s32 3, %v964
        %v966 = vrot.slane %v838, %v965
        %967 = vset.pattern.permute.xlu0 3
        %968 = vperm.xlu0 %967, %v758
        %v969 = vpop.permute.xlu0 %968
        %971 = vset.pattern.permute.xlu0 3
        %972 = vperm.xlu0 %971, %v761
        %v973 = vpop.permute.xlu0 %972
        %v975 = vmul.f32 %v966, %v969
        %v976 = vmul.f32 %v966, %v973
        %v977 = vlaneseq
        %v978 = vshrl.u32 %v977, 7
        %v979 = vsub.s32 4, %v978
        %v980 = vrot.slane %v838, %v979
        %981 = vset.pattern.permute.xlu0 4
        %982 = vperm.xlu0 %981, %v758
        %v983 = vpop.permute.xlu0 %982
        %985 = vset.pattern.permute.xlu0 4
        %986 = vperm.xlu0 %985, %v761
        %v987 = vpop.permute.xlu0 %986
        %v989 = vmul.f32 %v980, %v983
        %v990 = vmul.f32 %v980, %v987
        %v991 = vlaneseq
        %v992 = vshrl.u32 %v991, 7
        %v993 = vsub.s32 5, %v992
        %v994 = vrot.slane %v838, %v993
        %995 = vset.pattern.permute.xlu0 5
        %996 = vperm.xlu0 %995, %v758
        %v997 = vpop.permute.xlu0 %996
        %999 = vset.pattern.permute.xlu0 5
        %1000 = vperm.xlu0 %999, %v761
        %v1001 = vpop.permute.xlu0 %1000
        %v1003 = vmul.f32 %v994, %v997
        %v1004 = vmul.f32 %v994, %v1001
        %v1005 = vlaneseq
        %v1006 = vshrl.u32 %v1005, 7
        %v1007 = vsub.s32 6, %v1006
        %v1008 = vrot.slane %v838, %v1007
        %1009 = vset.pattern.permute.xlu0 6
        %1010 = vperm.xlu0 %1009, %v758
        %v1011 = vpop.permute.xlu0 %1010
        %1013 = vset.pattern.permute.xlu0 6
        %1014 = vperm.xlu0 %1013, %v761
        %v1015 = vpop.permute.xlu0 %1014
        %v1017 = vmul.f32 %v1008, %v1011
        %v1018 = vmul.f32 %v1008, %v1015
        %v1019 = vlaneseq
        %v1020 = vshrl.u32 %v1019, 7
        %v1021 = vsub.s32 7, %v1020
        %v1022 = vrot.slane %v838, %v1021
        %1023 = vset.pattern.permute.xlu0 7
        %1024 = vperm.xlu0 %1023, %v758
        %v1025 = vpop.permute.xlu0 %1024
        %1027 = vset.pattern.permute.xlu0 7
        %1028 = vperm.xlu0 %1027, %v761
        %v1029 = vpop.permute.xlu0 %1028
        %v1031 = vmul.f32 %v1022, %v1025
        %v1032 = vmul.f32 %v1022, %v1029
        %v1033 = vmul.f32 %v846, 0.0
        %v1034 = vmul.f32 %v848, 0.0
        %v1035 = vadd.f32 %v1033, %v933
        %v1036 = vadd.f32 %v1034, %v934
        %v1037 = vmul.f32 %v856, %v1035
        %v1038 = vmul.f32 %v858, %v1036
        %v1039 = vadd.f32 %v1037, %v947
        %v1040 = vadd.f32 %v1038, %v948
        %v1041 = vmul.f32 %v866, %v1039
        %v1042 = vmul.f32 %v868, %v1040
        %v1043 = vadd.f32 %v1041, %v961
        %v1044 = vadd.f32 %v1042, %v962
        %v1045 = vmul.f32 %v876, %v1043
        %v1046 = vmul.f32 %v878, %v1044
        %v1047 = vadd.f32 %v1045, %v975
        %v1048 = vadd.f32 %v1046, %v976
        %v1049 = vmul.f32 %v886, %v1047
        %v1050 = vmul.f32 %v888, %v1048
        %v1051 = vadd.f32 %v1049, %v989
        %v1052 = vadd.f32 %v1050, %v990
        %v1053 = vmul.f32 %v896, %v1051
        %v1054 = vmul.f32 %v898, %v1052
        %v1055 = vadd.f32 %v1053, %v1003
        %v1056 = vadd.f32 %v1054, %v1004
        %v1057 = vmul.f32 %v906, %v1055
        %v1058 = vmul.f32 %v908, %v1056
        %v1059 = vadd.f32 %v1057, %v1017
        %v1060 = vadd.f32 %v1058, %v1018
        %v1061 = vmul.f32 %v916, %v1059
        %v1062 = vmul.f32 %v918, %v1060
        %v1063 = vadd.f32 %v1061, %v1031
        %v1064 = vadd.f32 %v1062, %v1032
        %v1065 = vlaneseq
        %v1066 = vshrl.u32 %v1065, 7
        %v1067 = vlaneseq
        %v1068 = vand.u32 %v1067, 127
        %v1069 = vmul.u32 %v1066, 16
        %vm1070 = vcmp.ge.s32.totalorder %v1068, %v1069
        %v1071 = vadd.s32 %v1069, 16
        %vm1072 = vcmp.lt.s32.totalorder %v1068, %v1071
        %vm1073 = vmand %vm1070, %vm1072
        %v1074 = vsel %vm1073, %v831, 0.0
        %v1075 = vld [vmem:[%s9] sm:$0x1]
        %v1077 = vlaneseq
        %v1078 = vshrl.u32 %v1077, 7
        %v1079 = vsub.s32 0, %v1078
        %v1080 = vrot.slane %v1075, %v1079
        %v1082 = vmul.f32 %v610, %v1080
        %1083 = vmatprep.subr.mxu0 0.0
        %1084 = vmatpush1.msra.mxu0 %v1064
        %1085 = vmatprep.subr.mxu0 0.0
        %1086 = vmatpush1.msra.mxu0 %v1063
        %1087 = vmatprep.subr.mxu0 0.0
        %1088 = vmatpush1.msra.mxu0 %v1060
        %1089 = vmatprep.subr.mxu0 0.0
        %1090 = vmatpush1.msra.mxu0 %v1059
        %1091 = vmatprep.subr.mxu0 0.0
        %1092 = vmatpush1.msra.mxu0 %v1056
        %1093 = vmatprep.subr.mxu0 0.0
        %1094 = vmatpush1.msra.mxu0 %v1055
        %1095 = vmatprep.subr.mxu0 0.0
        %1096 = vmatpush1.msra.mxu0 %v1052
        %1097 = vmatprep.subr.mxu0 0.0
        %1098 = vmatpush1.msra.mxu0 %v1051
        %1099 = vmatprep.subr.mxu0 0.0
        %1100 = vmatpush1.msra.mxu0 %v1048
        %1101 = vmatprep.subr.mxu0 0.0
        %1102 = vmatpush1.msra.mxu0 %v1047
        %1103 = vmatprep.subr.mxu0 0.0
        %1104 = vmatpush1.msra.mxu0 %v1044
        %1105 = vmatprep.subr.mxu0 0.0
        %1106 = vmatpush1.msra.mxu0 %v1043
        %1107 = vmatprep.subr.mxu0 0.0
        %1108 = vmatpush1.msra.mxu0 %v1040
        %1109 = vmatprep.subr.mxu0 0.0
        %1110 = vmatpush1.msra.mxu0 %v1039
        %1111 = vmatprep.subr.mxu0 0.0
        %1112 = vmatpush1.msra.mxu0 %v1036
        %1113 = vmatprep.subr.mxu0 0.0
        %1114 = vmatpush1.msra.mxu0 %v1035
        %1115 = vmatprep.subr.mxu0 0.0
        %1116 = vmatpush2.msra.mxu0 0.0
        %1117 = vmatprep.subr.mxu0 0.0
        %1118 = vmatpush2.msra.mxu0 0.0
        %1119 = vmatprep.subr.mxu0 0.0
        %1120 = vmatpush2.msra.mxu0 0.0
        %1121 = vmatprep.subr.mxu0 0.0
        %1122 = vmatpush2.msra.mxu0 0.0
        %1123 = vmatprep.subr.mxu0 0.0
        %1124 = vmatpush2.msra.mxu0 0.0
        %1125 = vmatprep.subr.mxu0 0.0
        %1126 = vmatpush2.msra.mxu0 0.0
        %1127 = vmatprep.subr.mxu0 0.0
        %1128 = vmatpush2.msra.mxu0 0.0
        %1129 = vmatprep.subr.mxu0 0.0
        %1130 = vmatpush2.msra.mxu0 0.0
        %1131 = vmatprep.subr.mxu0 0.0
        %1132 = vmatpush2.msra.mxu0 0.0
        %1133 = vmatprep.subr.mxu0 0.0
        %1134 = vmatpush2.msra.mxu0 0.0
        %1135 = vmatprep.subr.mxu0 0.0
        %1136 = vmatpush2.msra.mxu0 0.0
        %1137 = vmatprep.subr.mxu0 0.0
        %1138 = vmatpush2.msra.mxu0 0.0
        %1139 = vmatprep.subr.mxu0 0.0
        %1140 = vmatpush2.msra.mxu0 0.0
        %1141 = vmatprep.subr.mxu0 0.0
        %1142 = vmatpush2.msra.mxu0 0.0
        %1143 = vmatprep.subr.mxu0 0.0
        %1144 = vmatpush2.msra.mxu0 0.0
        %1145 = vmatprep.subr.mxu0 0.0
        %1146 = vmatpush2.msra.mxu0 0.0
        %1147 = vmatprep.mubr.f32.mxu0 0.0
        %1148 = vmatmul.mubr.f32.gmra.mxu0 %v1074
        %v1149 = vpop.f32.mrf.mxu0
        %v1150 = vadd.f32 %v1082, %v1149
        %v1151 = vpop.f32.mrf.mxu0
        %1152 = vdwg.mxu0
        %v1153 = vmul.f32 %v545, 0.5
        %v1154 = vtanh.pop %v1153
        %v1155 = vadd.f32 %v1154, 1.0
        %v1156 = vmul.f32 %v1155, 0.5
        %v1157 = vmul.f32 %v545, %v1156
        %1159 = vrot.lane.b32.xlu0 %v1157, 64
        %v1160 = vpop.permute.xlu0 %1159
        %v1162 = vmul.f32 %v1150, %v1160
        %v1163 = vpack.c.bf16 %v1162, %v1162
        %v1164 = vld [vmem:[#allocation13] sm:$0xf]
        %v1165 = vld [vmem:[#allocation13 + $0x4] sm:$0xf]
        %v1166 = vld [vmem:[#allocation13 + $0x8] sm:$0xf]
        %v1167 = vld [vmem:[#allocation13 + $0xc] sm:$0xf]
        %v1168 = vld [vmem:[#allocation13 + $0x10] sm:$0xf]
        %v1169 = vld [vmem:[#allocation13 + $0x14] sm:$0xf]
        %v1170 = vld [vmem:[#allocation13 + $0x18] sm:$0xf]
        %v1171 = vld [vmem:[#allocation13 + $0x1c] sm:$0xf]
        %v1180 = vunpack.c.l.b16 %v1164
        %v1181 = vunpack.c.l.b16 %v1165
        %v1182 = vunpack.c.l.b16 %v1166
        %v1183 = vunpack.c.l.b16 %v1167
        %v1184 = vunpack.c.l.b16 %v1168
        %v1185 = vunpack.c.l.b16 %v1169
        %v1186 = vunpack.c.l.b16 %v1170
        %v1187 = vunpack.c.l.b16 %v1171
        %v1188 = vpack.c.b16 %v1181, %v1180
        %v1189 = vpack.c.b16 %v1183, %v1182
        %v1190 = vpack.c.b16 %v1185, %v1184
        %v1191 = vpack.c.b16 %v1187, %v1186
        %v1197 = vsel %vm627, %v1163, 0
        %1199 = vmatprep.subr.bf16.mxu0 0
        %1200 = vmatpush1.bf16.msra.mxu0 0
        %1201 = vmatprep.subr.bf16.mxu0 0
        %1202 = vmatpush1.bf16.msra.mxu0 0
        %1203 = vmatprep.subr.bf16.mxu0 0
        %1204 = vmatpush1.bf16.msra.mxu0 0
        %1205 = vmatprep.subr.bf16.mxu0 0
        %1206 = vmatpush1.bf16.msra.mxu0 0
        %1207 = vmatprep.subr.bf16.mxu0 0
        %1208 = vmatpush1.bf16.msra.mxu0 %v1191
        %1209 = vmatprep.subr.bf16.mxu0 0
        %1210 = vmatpush1.bf16.msra.mxu0 %v1190
        %1211 = vmatprep.subr.bf16.mxu0 0
        %1212 = vmatpush1.bf16.msra.mxu0 %v1189
        %1213 = vmatprep.subr.bf16.mxu0 0
        %1214 = vmatpush1.bf16.msra.mxu0 %v1188
        %1215 = vmatprep.subr.bf16.mxu0 0
        %1216 = vmatpush2.bf16.msra.mxu0 0
        %1217 = vmatprep.subr.bf16.mxu0 0
        %1218 = vmatpush2.bf16.msra.mxu0 0
        %1219 = vmatprep.subr.bf16.mxu0 0
        %1220 = vmatpush2.bf16.msra.mxu0 0
        %1221 = vmatprep.subr.bf16.mxu0 0
        %1222 = vmatpush2.bf16.msra.mxu0 0
        %1223 = vmatprep.subr.bf16.mxu0 0
        %1224 = vmatpush2.bf16.msra.mxu0 0
        %1225 = vmatprep.subr.bf16.mxu0 0
        %1226 = vmatpush2.bf16.msra.mxu0 0
        %1227 = vmatprep.subr.bf16.mxu0 0
        %1228 = vmatpush2.bf16.msra.mxu0 0
        %1229 = vmatprep.subr.bf16.mxu0 0
        %1230 = vmatpush2.bf16.msra.mxu0 0
        %1231 = vmatprep.mubr.bf16.mxu0 0
        %1232 = vmatmul.mubr.bf16.gmra.mxu0 %v1197
        %v1233 = vpop.f32.mrf.mxu0
        %v1234 = vadd.f32 0.0, %v1233
        %v1235 = vpop.f32.mrf.mxu0
        %v1236 = vpop.f32.mrf.mxu0
        %v1237 = vpop.f32.mrf.mxu0
        %1238 = vdwg.mxu0
        %1239 = vst [vmem:[%s486] sm:$0xff] %v1234
        %s1240 = sand.u32 %s275, 1
        %s1241 = scalar_lea.sflag [#allocation4], %s1240
        %s1242 = sand.u32 %s275, 1
        %s1243 = smul.addr %s1242, 8
        %s1244 = scalar_lea.vmem [#allocation14], %s1243
        // Predicated region
        $region93: #{tpu_custom_call.1} parent=63 // pred_check
          %p1245 = pneg %p285
        $region94: #{tpu_custom_call.1} parent=63 // pred_check_branch
          %1247 = sbr.rel (%p1245) target = $region96
        $region95: #{tpu_custom_call.1} parent=63 // pred_region
          %s1249 = ssub.s32 128, 128
          %1250 = vsyncadd %s1241, %s1249
          %s1251 = smul.addr %s31, 128
          %s1252 = scalar_lea.hbm %s11, %s1251
          %s1254 = sshll.u32 %s1244, 4
          %s1255 = int_to_ptr.vmem [resolvable:$true] %s1254
          %1257 = dma.vmem_to_hbm [thread:$0]  %s1255, 128, %s1252, %s1241
        $region96: #{tpu_custom_call.1} parent=63 // pred_fallthru
          _
      $region64: #{tpu_custom_call.1} parent=5 // pred_fallthru
        _
      %p1258 = scmp.le.s32.totalorder 2, %s26
      // Predicated region
      $region97: #{tpu_custom_call.1} parent=5 // pred_check
        %p1259 = pneg %p1258
      $region98: #{tpu_custom_call.1} parent=5 // pred_check_branch
        %1261 = sbr.rel (%p1259) target = $region100
      $region99: #{tpu_custom_call.1} parent=5 // pred_region
        %s1262 = ssub.s32 %s26, 2
        // Predicated region
        $region101: #{tpu_custom_call.1} parent=99 // pred_check
          %p1263 = pneg %p291
        $region102: #{tpu_custom_call.1} parent=99 // pred_check_branch
          %1265 = sbr.rel (%p1263) target = $region104
        $region103: #{tpu_custom_call.1} parent=99 // pred_region
          %s1266 = sand.u32 %s276, 1
          %s1267 = scalar_lea.sflag [#allocation4], %s1266
          %s1268 = sand.u32 %s276, 1
          %s1269 = smul.addr %s1268, 8
          %s1270 = scalar_lea.vmem [#allocation14], %s1269
          %1271 = dma.done %s1267, 128
        $region104: #{tpu_custom_call.1} parent=99 // pred_fallthru
          _
      $region100: #{tpu_custom_call.1} parent=5 // pred_fallthru
        _
    $region6: #{tpu_custom_call.1} parent=1 // loop_footer
      %s30 = sadd.s32 1, %s26
    $region7: #{tpu_custom_call.1} parent=1 // loop_footer_branch
      %25 = sbr.rel target = $region3
    $region8: #{tpu_custom_call.1} parent=1 // loop_exit
      _
    %1272 = vsyncpa [#allocation3], 1
    %s1273 = scalar_lea.sflag [#allocation3], 1
    %1274 = vsyncpa %s1273, 1
    %1275 = vsyncpa [#allocation6], 1
    %1276 = vsyncpa [#allocation9], 1
    %1277 = vsyncpa [#allocation12], 1
    %1278 = vsyncpa [#allocation4], 1
    %s1279 = scalar_lea.sflag [#allocation4], 1
    %1280 = vsyncpa %s1279, 1

</llo_original>
